<compile_context>
chip_gen: v7x
topology: tpu7x:2x2x1
jax: 0.10.0
libtpu: 0.0.40
codegen_flags: <defaults>
</compile_context>

<pallas_src>
import functools

import jax
import jax.numpy as jnp
from jax.experimental import pallas as pl
from jax.experimental.pallas import tpu as pltpu


def _up_block_kernel(xs_ref, br_ref, wup_ref, ubias_ref, w1_ref, b1_ref,
                     w2_ref, b2_ref, vmask_ref, o_ref, *, Wp, HWp, Cout):
    """One batch element, fully resident on-chip.

    xs_ref    : [1, 4*Cin, LCAT]  bf16  stride-2-dilated x on the padded grid
    br_ref    : [1, Cb,    LCAT]  bf16  zero-padded cropped bridge slab
    wup_ref   : [Cup, 4*Cin]      bf16  ConvTranspose2d weights (per phase)
    ubias_ref : [Cup, LCAT]       f32   ConvTranspose2d bias at interior pixels
    w1_ref    : [Cout, 9*Ccat]    bf16  conv1 weights, cols = (ky, kx, c)
    w2_ref    : [Cout, 9*Cout]    bf16  conv2 weights, cols = (ky, kx, c)
    b1_ref/b2_ref : [Cout, 1]     f32
    vmask_ref : [1, Ho*Wp]        f32   1.0 on real columns, 0.0 on the 2
                                        wrap-around columns of the over-grid
    o_ref     : [1, Cout, Ho*Wp]  f32   lane-dense output block
    """
    f32 = jnp.float32
    bf16 = jnp.bfloat16

    # ---- ConvTranspose2d(k=2, s=2) == 1x1 conv over the 4-phase dilated x:
    # a single bf16 MXU matmul, result already on the zero-padded fine grid
    # (ring pixels stay exactly zero; bias is masked to interior pixels).
    up = jnp.dot(wup_ref[...], xs_ref[0], preferred_element_type=f32)
    up = up + ubias_ref[...]                                  # [Cup, LCAT]

    # ---- Fused channel concat: up rows on top of the bridge rows. The slab is
    # flat [Ccat, LCAT] with LCAT = Hp*Wp + 2, channel-major, lane-dense.
    cat = jnp.concatenate([up.astype(bf16), br_ref[0]], axis=0)   # [Ccat, LCAT]
    lcat = cat.shape[1]

    # ---- conv1: fused im2col. The 9 taps are *contiguous* windows of the flat
    # padded slab (offset ky*Wp + kx); stacking them gives a [9*Ccat, Ho*Wp]
    # block and ONE K=9*Ccat matmul replaces 9 accumulating matmuls.
    col1 = jnp.concatenate(
        [cat[:, ky * Wp + kx: ky * Wp + kx + HWp]
         for ky in range(3) for kx in range(3)], axis=0)           # [9*Ccat, Ho*Wp]
    h1 = jnp.dot(w1_ref[...], col1, preferred_element_type=f32) + b1_ref[...]
    h1 = jnp.maximum(h1, 0.0) * vmask_ref[...]   # zero the 2 wrap-around columns

    # ---- Re-embed the conv1 activation into its own zero-padded flat slab
    # with a single full-width value (halo comes from the concat'd zero blocks).
    head = jnp.zeros((Cout, Wp + 1), bf16)
    tail = jnp.zeros((Cout, lcat - (Wp + 1) - HWp), bf16)
    p2 = jnp.concatenate([head, h1.astype(bf16), tail], axis=1)    # [Cout, LCAT]

    # ---- conv2: same fused im2col, K = 9*Cout.
    col2 = jnp.concatenate(
        [p2[:, ky * Wp + kx: ky * Wp + kx + HWp]
         for ky in range(3) for kx in range(3)], axis=0)           # [9*Cout, Ho*Wp]
    h2 = jnp.dot(w2_ref[...], col2, preferred_element_type=f32) + b2_ref[...]

    # Lane-dense store: spatial (Ho*Wp) on the 128-lane axis.
    o_ref[0] = jnp.maximum(h2, 0.0)


def unet_up_block_forward(x, bridge, params):
    """Matches UNetUpBlock(up_mode='upconv', padding=True, batch_norm=False)."""
    N, Cin, H, W = x.shape
    up_w, up_b = params["up_w"], params["up_b"]        # [Cin, Cup, 2, 2], [Cup]
    c1_w, c1_b = params["c1_w"], params["c1_b"]        # [Cout, Ccat, 3, 3]
    c2_w, c2_b = params["c2_w"], params["c2_b"]        # [Cout, Cout, 3, 3]
    Cup = up_w.shape[1]
    Cout = c1_w.shape[0]
    Cb = bridge.shape[1]
    Ccat = Cup + Cb
    assert c1_w.shape[1] == Ccat, "conv1 expects concat(up, crop) channels"

    Ho, Wo = 2 * H, 2 * W
    Hp, Wp = Ho + 2, Wo + 2                 # 1-pixel conv halo on each side
    HWp = Ho * Wp                           # over-computed (Ho, Wp) grid
    LCAT = Hp * Wp + 2                      # +2 so the (2,2) tap window fits

    f32, bf16 = jnp.float32, jnp.bfloat16

    # ---- center_crop(bridge) + conv1 halo -> padded flat slab (channel-major).
    dy0 = (bridge.shape[2] - Ho) // 2
    dx0 = (bridge.shape[3] - Wo) // 2
    crop = bridge[:, :, dy0:dy0 + Ho, dx0:dx0 + Wo]
    br_slab = jnp.pad(crop, ((0, 0), (0, 0), (1, 1), (1, 1)))
    br_slab = br_slab.reshape(N, Cb, Hp * Wp)
    br_slab = jnp.pad(br_slab, ((0, 0), (0, 0), (0, LCAT - Hp * Wp))).astype(bf16)

    # ---- Stride-2 dilation of x onto the padded fine grid, one copy per 2x2
    # phase (pure zero-insertion layout plumbing; all arithmetic is in-kernel).
    zero = jnp.zeros((), x.dtype)
    phases = []
    for di in range(2):
        for dj in range(2):
            phases.append(jax.lax.pad(
                x, zero,
                ((0, 0, 0), (0, 0, 0),
                 (1 + di, 2 - di, 1), (1 + dj, 2 - dj, 1))))
    x_scat = jnp.concatenate(phases, axis=1)            # [N, 4*Cin, Hp, Wp]
    x_scat = x_scat.reshape(N, 4 * Cin, Hp * Wp)
    x_scat = jnp.pad(x_scat, ((0, 0), (0, 0), (0, LCAT - Hp * Wp))).astype(bf16)

    # ---- Weight / bias repacks (tiny, one-time).  Column orders match the
    # in-kernel row orders exactly: (di, dj, c) for wup4, (ky, kx, c) for convs.
    wup4 = jnp.transpose(up_w, (1, 2, 3, 0)).reshape(Cup, 4 * Cin).astype(bf16)
    w1m = jnp.transpose(c1_w, (0, 2, 3, 1)).reshape(Cout, 9 * Ccat).astype(bf16)
    w2m = jnp.transpose(c2_w, (0, 2, 3, 1)).reshape(Cout, 9 * Cout).astype(bf16)
    b1m = c1_b.reshape(Cout, 1).astype(f32)
    b2m = c2_b.reshape(Cout, 1).astype(f32)

    # ConvTranspose bias only at interior (non-halo) pixels of the padded grid.
    interior = jnp.pad(jnp.ones((Ho, Wo), f32), ((1, 1), (1, 1))).reshape(Hp * Wp)
    interior = jnp.pad(interior, (0, LCAT - Hp * Wp))
    ubias = up_b.astype(f32).reshape(Cup, 1) * interior[None, :]    # [Cup, LCAT]

    # Valid-column mask on the over-computed (Ho, Wp) grid.
    vmask = (jnp.arange(HWp, dtype=jnp.int32) % Wp < Wo).astype(f32)[None, :]

    kernel = functools.partial(_up_block_kernel, Wp=Wp, HWp=HWp, Cout=Cout)

    flops = 2 * N * ((4 * Cin) * Cup * LCAT
                     + 9 * Ccat * Cout * HWp
                     + 9 * Cout * Cout * HWp)
    bytes_accessed = (2 * (x_scat.size + br_slab.size + wup4.size
                           + w1m.size + w2m.size)
                      + 4 * (ubias.size + b1m.size + b2m.size + vmask.size)
                      + 4 * N * Cout * HWp)

    out_flat = pl.pallas_call(
        kernel,
        out_shape=jax.ShapeDtypeStruct((N, Cout, HWp), f32),
        grid=(N,),
        in_specs=[
            pl.BlockSpec((1, 4 * Cin, LCAT), lambda n: (n, 0, 0)),
            pl.BlockSpec((1, Cb, LCAT), lambda n: (n, 0, 0)),
            pl.BlockSpec((Cup, 4 * Cin), lambda n: (0, 0)),
            pl.BlockSpec((Cup, LCAT), lambda n: (0, 0)),
            pl.BlockSpec((Cout, 9 * Ccat), lambda n: (0, 0)),
            pl.BlockSpec((Cout, 1), lambda n: (0, 0)),
            pl.BlockSpec((Cout, 9 * Cout), lambda n: (0, 0)),
            pl.BlockSpec((Cout, 1), lambda n: (0, 0)),
            pl.BlockSpec((1, HWp), lambda n: (0, 0)),
        ],
        out_specs=pl.BlockSpec((1, Cout, HWp), lambda n: (n, 0, 0)),
        compiler_params=pltpu.CompilerParams(
            dimension_semantics=("parallel",)),   # batch -> megacore / 2 TCs
        cost_estimate=pl.CostEstimate(
            flops=int(flops), transcendentals=0,
            bytes_accessed=int(bytes_accessed)),
    )(x_scat, br_slab, wup4, ubias, w1m, b1m, w2m, b2m, vmask)

    # Drop the 2 over-computed columns; metadata-cheap HBM slice in the wrapper.
    return out_flat.reshape(N, Cout, Ho, Wp)[:, :, :, :Wo]


# ------------------------------ plain-JAX reference --------------------------

def _conv3x3_relu(x, w, b):
    out = jax.lax.conv_general_dilated(
        x, w, window_strides=(1, 1), padding=((1, 1), (1, 1)),
        dimension_numbers=("NCHW", "OIHW", "NCHW"))
    return jnp.maximum(out + b[None, :, None, None], 0.0)


def ref_forward(x, bridge, params):
    N, Cin, H, W = x.shape
    w = params["up_w"]                              # [Cin, Cup, 2, 2]
    Cup = w.shape[1]
    t = jnp.einsum("nchw,code->nhwdeo", x, w)
    t = jnp.transpose(t, (0, 1, 3, 2, 4, 5)).reshape(N, 2 * H, 2 * W, Cup)
    up = jnp.transpose(t, (0, 3, 1, 2)) + params["up_b"][None, :, None, None]

    th, tw = up.shape[2], up.shape[3]
    dy0 = (bridge.shape[2] - th) // 2
    dx0 = (bridge.shape[3] - tw) // 2
    crop = bridge[:, :, dy0:dy0 + th, dx0:dx0 + tw]
    out = jnp.concatenate([up, crop], axis=1)
    out = _conv3x3_relu(out, params["c1_w"], params["c1_b"])
    out = _conv3x3_relu(out, params["c2_w"], params["c2_b"])
    return out


# ----------------------------------- main ------------------------------------

if __name__ == "__main__":
    # Config: UNetUpBlock(in_size=8, out_size=4, 'upconv', padding=True, bn=False)
    in_size, out_size = 8, 4
    N, H, W = 2, 16, 16                     # x: [2, 8, 16, 16]
    bridge_c = in_size - out_size           # concat(up, crop) has in_size chans

    keys = jax.random.split(jax.random.PRNGKey(0), 8)
    params = {
        "up_w": 0.1 * jax.random.normal(keys[0], (in_size, out_size, 2, 2), jnp.float32),
        "up_b": 0.1 * jax.random.normal(keys[1], (out_size,), jnp.float32),
        "c1_w": 0.1 * jax.random.normal(keys[2], (out_size, in_size, 3, 3), jnp.float32),
        "c1_b": 0.1 * jax.random.normal(keys[3], (out_size,), jnp.float32),
        "c2_w": 0.1 * jax.random.normal(keys[4], (out_size, out_size, 3, 3), jnp.float32),
        "c2_b": 0.1 * jax.random.normal(keys[5], (out_size,), jnp.float32),
    }
    x = jax.random.normal(keys[6], (N, in_size, H, W), jnp.float32)
    bridge = jax.random.normal(keys[7], (N, bridge_c, 2 * H, 2 * W), jnp.float32)

    out = jax.block_until_ready(jax.jit(unet_up_block_forward)(x, bridge, params))
    assert out.shape == (N, out_size, 2 * H, 2 * W), out.shape

    ref = jax.block_until_ready(jax.jit(ref_forward)(x, bridge, params))
    max_err = float(jnp.abs(out - ref).max())
    # bf16 MXU operands with f32 accumulation vs. the f32 reference.
    assert jnp.allclose(out, ref, atol=5e-2, rtol=5e-2), f"max_err={max_err}"

    print("KERNEL_OK")
</pallas_src>

<mosaic_0001>
module attributes {stable_mosaic.version = 11 : i64} {
  func.func @_up_block_kernel(%arg0: i32, %arg1: memref<1x32x1158xbf16, #tpu.memory_space<vmem>>, %arg2: memref<1x4x1158xbf16, #tpu.memory_space<vmem>>, %arg3: memref<4x32xbf16, #tpu.memory_space<vmem>>, %arg4: memref<4x1158xf32, #tpu.memory_space<vmem>>, %arg5: memref<4x72xbf16, #tpu.memory_space<vmem>>, %arg6: memref<4x1xf32, #tpu.memory_space<vmem>>, %arg7: memref<4x36xbf16, #tpu.memory_space<vmem>>, %arg8: memref<4x1xf32, #tpu.memory_space<vmem>>, %arg9: memref<1x1088xf32, #tpu.memory_space<vmem>>, %arg10: memref<1x4x1088xf32, #tpu.memory_space<vmem>>) attributes {dimension_semantics = [#tpu.dimension_semantics<parallel>], iteration_bounds = array<i64: 2>, scalar_prefetch = 0 : i64, scratch_operands = 0 : i64, tpu.core_type = #tpu.core_type<tc>, window_params = [{transform_indices = @transform_0, window_bounds = array<i64: 1, 32, 1158>}, {transform_indices = @transform_1, window_bounds = array<i64: 1, 4, 1158>}, {pipeline_mode = #tpu.pipeline_mode<synchronous>, transform_indices = @transform_2, window_bounds = array<i64: 4, 32>}, {pipeline_mode = #tpu.pipeline_mode<synchronous>, transform_indices = @transform_3, window_bounds = array<i64: 4, 1158>}, {pipeline_mode = #tpu.pipeline_mode<synchronous>, transform_indices = @transform_4, window_bounds = array<i64: 4, 72>}, {pipeline_mode = #tpu.pipeline_mode<synchronous>, transform_indices = @transform_5, window_bounds = array<i64: 4, 1>}, {pipeline_mode = #tpu.pipeline_mode<synchronous>, transform_indices = @transform_6, window_bounds = array<i64: 4, 36>}, {pipeline_mode = #tpu.pipeline_mode<synchronous>, transform_indices = @transform_7, window_bounds = array<i64: 4, 1>}, {pipeline_mode = #tpu.pipeline_mode<synchronous>, transform_indices = @transform_8, window_bounds = array<i64: 1, 1088>}, {transform_indices = @transform_9, window_bounds = array<i64: 1, 4, 1088>}]} {
    %c0 = arith.constant 0 : index
    %c0_0 = arith.constant 0 : index
    %0 = vector.load %arg3[%c0, %c0_0] : memref<4x32xbf16, #tpu.memory_space<vmem>>, vector<4x32xbf16>
    %c0_1 = arith.constant 0 : index
    %c0_2 = arith.constant 0 : index
    %c0_3 = arith.constant 0 : index
    %1 = vector.load %arg1[%c0_1, %c0_2, %c0_3] : memref<1x32x1158xbf16, #tpu.memory_space<vmem>>, vector<1x32x1158xbf16>
    %2 = vector.shape_cast %1 : vector<1x32x1158xbf16> to vector<32x1158xbf16>
    %cst = arith.constant dense<0.000000e+00> : vector<4x1158xf32>
    %3 = tpu.matmul %0, %2, %cst {dimension_numbers = #tpu.dot_dimension_numbers<[1], [0], [0], [1], [0, 0, 1, 1], [], []>} : vector<4x32xbf16>, vector<32x1158xbf16>, vector<4x1158xf32> -> vector<4x1158xf32>
    %c0_4 = arith.constant 0 : index
    %c0_5 = arith.constant 0 : index
    %4 = vector.load %arg4[%c0_4, %c0_5] : memref<4x1158xf32, #tpu.memory_space<vmem>>, vector<4x1158xf32>
    %5 = arith.addf %3, %4 : vector<4x1158xf32>
    %6 = arith.truncf %5 : vector<4x1158xf32> to vector<4x1158xbf16>
    %c0_6 = arith.constant 0 : index
    %c0_7 = arith.constant 0 : index
    %c0_8 = arith.constant 0 : index
    %7 = vector.load %arg2[%c0_6, %c0_7, %c0_8] : memref<1x4x1158xbf16, #tpu.memory_space<vmem>>, vector<1x4x1158xbf16>
    %8 = vector.shape_cast %7 : vector<1x4x1158xbf16> to vector<4x1158xbf16>
    %9 = tpu.concatenate %6, %8 in 0 : vector<4x1158xbf16>, vector<4x1158xbf16> -> vector<8x1158xbf16>
    %10 = vector.extract_strided_slice %9 {offsets = [0, 0], sizes = [8, 1088], strides = [1, 1]} : vector<8x1158xbf16> to vector<8x1088xbf16>
    %11 = vector.extract_strided_slice %9 {offsets = [0, 1], sizes = [8, 1088], strides = [1, 1]} : vector<8x1158xbf16> to vector<8x1088xbf16>
    %12 = vector.extract_strided_slice %9 {offsets = [0, 2], sizes = [8, 1088], strides = [1, 1]} : vector<8x1158xbf16> to vector<8x1088xbf16>
    %13 = vector.extract_strided_slice %9 {offsets = [0, 34], sizes = [8, 1088], strides = [1, 1]} : vector<8x1158xbf16> to vector<8x1088xbf16>
    %14 = vector.extract_strided_slice %9 {offsets = [0, 35], sizes = [8, 1088], strides = [1, 1]} : vector<8x1158xbf16> to vector<8x1088xbf16>
    %15 = vector.extract_strided_slice %9 {offsets = [0, 36], sizes = [8, 1088], strides = [1, 1]} : vector<8x1158xbf16> to vector<8x1088xbf16>
    %16 = vector.extract_strided_slice %9 {offsets = [0, 68], sizes = [8, 1088], strides = [1, 1]} : vector<8x1158xbf16> to vector<8x1088xbf16>
    %17 = vector.extract_strided_slice %9 {offsets = [0, 69], sizes = [8, 1088], strides = [1, 1]} : vector<8x1158xbf16> to vector<8x1088xbf16>
    %18 = vector.extract_strided_slice %9 {offsets = [0, 70], sizes = [8, 1088], strides = [1, 1]} : vector<8x1158xbf16> to vector<8x1088xbf16>
    %19 = tpu.concatenate %10, %11, %12, %13, %14, %15, %16, %17, %18 in 0 : vector<8x1088xbf16>, vector<8x1088xbf16>, vector<8x1088xbf16>, vector<8x1088xbf16>, vector<8x1088xbf16>, vector<8x1088xbf16>, vector<8x1088xbf16>, vector<8x1088xbf16>, vector<8x1088xbf16> -> vector<72x1088xbf16>
    %c0_9 = arith.constant 0 : index
    %c0_10 = arith.constant 0 : index
    %20 = vector.load %arg5[%c0_9, %c0_10] : memref<4x72xbf16, #tpu.memory_space<vmem>>, vector<4x72xbf16>
    %cst_11 = arith.constant dense<0.000000e+00> : vector<4x1088xf32>
    %21 = tpu.matmul %20, %19, %cst_11 {dimension_numbers = #tpu.dot_dimension_numbers<[1], [0], [0], [1], [0, 0, 1, 1], [], []>} : vector<4x72xbf16>, vector<72x1088xbf16>, vector<4x1088xf32> -> vector<4x1088xf32>
    %c0_12 = arith.constant 0 : index
    %c0_13 = arith.constant 0 : index
    %22 = vector.load %arg6[%c0_12, %c0_13] : memref<4x1xf32, #tpu.memory_space<vmem>>, vector<4x1xf32>
    %23 = vector.broadcast %22 : vector<4x1xf32> to vector<4x1088xf32>
    %24 = arith.addf %21, %23 : vector<4x1088xf32>
    %cst_14 = arith.constant 0.000000e+00 : f32
    %25 = vector.broadcast %cst_14 : f32 to vector<4x1088xf32>
    %26 = arith.maximumf %24, %25 : vector<4x1088xf32>
    %c0_15 = arith.constant 0 : index
    %c0_16 = arith.constant 0 : index
    %27 = vector.load %arg9[%c0_15, %c0_16] : memref<1x1088xf32, #tpu.memory_space<vmem>>, vector<1x1088xf32>
    %28 = vector.broadcast %27 : vector<1x1088xf32> to vector<4x1088xf32>
    %29 = arith.mulf %26, %28 : vector<4x1088xf32>
    %cst_17 = arith.constant 0.000000e+00 : bf16
    %30 = vector.broadcast %cst_17 : bf16 to vector<4x35xbf16>
    %cst_18 = arith.constant 0.000000e+00 : bf16
    %31 = vector.broadcast %cst_18 : bf16 to vector<4x35xbf16>
    %32 = arith.truncf %29 : vector<4x1088xf32> to vector<4x1088xbf16>
    %33 = tpu.concatenate %30, %32, %31 in 1 : vector<4x35xbf16>, vector<4x1088xbf16>, vector<4x35xbf16> -> vector<4x1158xbf16>
    %34 = vector.extract_strided_slice %33 {offsets = [0, 0], sizes = [4, 1088], strides = [1, 1]} : vector<4x1158xbf16> to vector<4x1088xbf16>
    %35 = vector.extract_strided_slice %33 {offsets = [0, 1], sizes = [4, 1088], strides = [1, 1]} : vector<4x1158xbf16> to vector<4x1088xbf16>
    %36 = vector.extract_strided_slice %33 {offsets = [0, 2], sizes = [4, 1088], strides = [1, 1]} : vector<4x1158xbf16> to vector<4x1088xbf16>
    %37 = vector.extract_strided_slice %33 {offsets = [0, 34], sizes = [4, 1088], strides = [1, 1]} : vector<4x1158xbf16> to vector<4x1088xbf16>
    %38 = vector.extract_strided_slice %33 {offsets = [0, 35], sizes = [4, 1088], strides = [1, 1]} : vector<4x1158xbf16> to vector<4x1088xbf16>
    %39 = vector.extract_strided_slice %33 {offsets = [0, 36], sizes = [4, 1088], strides = [1, 1]} : vector<4x1158xbf16> to vector<4x1088xbf16>
    %40 = vector.extract_strided_slice %33 {offsets = [0, 68], sizes = [4, 1088], strides = [1, 1]} : vector<4x1158xbf16> to vector<4x1088xbf16>
    %41 = vector.extract_strided_slice %33 {offsets = [0, 69], sizes = [4, 1088], strides = [1, 1]} : vector<4x1158xbf16> to vector<4x1088xbf16>
    %42 = vector.extract_strided_slice %33 {offsets = [0, 70], sizes = [4, 1088], strides = [1, 1]} : vector<4x1158xbf16> to vector<4x1088xbf16>
    %43 = tpu.concatenate %34, %35, %36, %37, %38, %39, %40, %41, %42 in 0 : vector<4x1088xbf16>, vector<4x1088xbf16>, vector<4x1088xbf16>, vector<4x1088xbf16>, vector<4x1088xbf16>, vector<4x1088xbf16>, vector<4x1088xbf16>, vector<4x1088xbf16>, vector<4x1088xbf16> -> vector<36x1088xbf16>
    %c0_19 = arith.constant 0 : index
    %c0_20 = arith.constant 0 : index
    %44 = vector.load %arg7[%c0_19, %c0_20] : memref<4x36xbf16, #tpu.memory_space<vmem>>, vector<4x36xbf16>
    %cst_21 = arith.constant dense<0.000000e+00> : vector<4x1088xf32>
    %45 = tpu.matmul %44, %43, %cst_21 {dimension_numbers = #tpu.dot_dimension_numbers<[1], [0], [0], [1], [0, 0, 1, 1], [], []>} : vector<4x36xbf16>, vector<36x1088xbf16>, vector<4x1088xf32> -> vector<4x1088xf32>
    %c0_22 = arith.constant 0 : index
    %c0_23 = arith.constant 0 : index
    %46 = vector.load %arg8[%c0_22, %c0_23] : memref<4x1xf32, #tpu.memory_space<vmem>>, vector<4x1xf32>
    %47 = vector.broadcast %46 : vector<4x1xf32> to vector<4x1088xf32>
    %48 = arith.addf %45, %47 : vector<4x1088xf32>
    %cst_24 = arith.constant 0.000000e+00 : f32
    %49 = vector.broadcast %cst_24 : f32 to vector<4x1088xf32>
    %50 = arith.maximumf %48, %49 : vector<4x1088xf32>
    %c0_25 = arith.constant 0 : index
    %c0_26 = arith.constant 0 : index
    %c0_27 = arith.constant 0 : index
    %51 = vector.load %arg10[%c0_25, %c0_26, %c0_27] : memref<1x4x1088xf32, #tpu.memory_space<vmem>>, vector<1x4x1088xf32>
    %52 = vector.shape_cast %51 : vector<1x4x1088xf32> to vector<4x1088xf32>
    %53 = vector.shape_cast %50 : vector<4x1088xf32> to vector<1x4x1088xf32>
    tpu.vector_store %arg10[%c0_25, %c0_26, %c0_27], %53 {strides = array<i32>} : memref<1x4x1088xf32, #tpu.memory_space<vmem>>, vector<1x4x1088xf32>,
    return
  }
  func.func @transform_0(%arg0: i32) -> (i32, i32, i32) {
    %c0_i32 = arith.constant 0 : i32
    %c0_i32_0 = arith.constant 0 : i32
    %c0_i32_1 = arith.constant 0 : i32
    return %arg0, %c0_i32, %c0_i32_0 : i32, i32, i32
  }
  func.func @transform_1(%arg0: i32) -> (i32, i32, i32) {
    %c0_i32 = arith.constant 0 : i32
    %c0_i32_0 = arith.constant 0 : i32
    %c0_i32_1 = arith.constant 0 : i32
    return %arg0, %c0_i32, %c0_i32_0 : i32, i32, i32
  }
  func.func @transform_2(%arg0: i32) -> (i32, i32) {
    %c0_i32 = arith.constant 0 : i32
    %c0_i32_0 = arith.constant 0 : i32
    %c0_i32_1 = arith.constant 0 : i32
    return %c0_i32, %c0_i32_0 : i32, i32
  }
  func.func @transform_3(%arg0: i32) -> (i32, i32) {
    %c0_i32 = arith.constant 0 : i32
    %c0_i32_0 = arith.constant 0 : i32
    %c0_i32_1 = arith.constant 0 : i32
    return %c0_i32, %c0_i32_0 : i32, i32
  }
  func.func @transform_4(%arg0: i32) -> (i32, i32) {
    %c0_i32 = arith.constant 0 : i32
    %c0_i32_0 = arith.constant 0 : i32
    %c0_i32_1 = arith.constant 0 : i32
    return %c0_i32, %c0_i32_0 : i32, i32
  }
  func.func @transform_5(%arg0: i32) -> (i32, i32) {
    %c0_i32 = arith.constant 0 : i32
    %c0_i32_0 = arith.constant 0 : i32
    %c0_i32_1 = arith.constant 0 : i32
    return %c0_i32, %c0_i32_0 : i32, i32
  }
  func.func @transform_6(%arg0: i32) -> (i32, i32) {
    %c0_i32 = arith.constant 0 : i32
    %c0_i32_0 = arith.constant 0 : i32
    %c0_i32_1 = arith.constant 0 : i32
    return %c0_i32, %c0_i32_0 : i32, i32
  }
  func.func @transform_7(%arg0: i32) -> (i32, i32) {
    %c0_i32 = arith.constant 0 : i32
    %c0_i32_0 = arith.constant 0 : i32
    %c0_i32_1 = arith.constant 0 : i32
    return %c0_i32, %c0_i32_0 : i32, i32
  }
  func.func @transform_8(%arg0: i32) -> (i32, i32) {
    %c0_i32 = arith.constant 0 : i32
    %c0_i32_0 = arith.constant 0 : i32
    %c0_i32_1 = arith.constant 0 : i32
    return %c0_i32, %c0_i32_0 : i32, i32
  }
  func.func @transform_9(%arg0: i32) -> (i32, i32, i32) {
    %c0_i32 = arith.constant 0 : i32
    %c0_i32_0 = arith.constant 0 : i32
    %c0_i32_1 = arith.constant 0 : i32
    return %arg0, %c0_i32, %c0_i32_0 : i32, i32, i32
  }
}

</mosaic_0001>

<llo_original>
// kernel: unet_up_block_forward.1
$region0: #{unet_up_block_forward.1}
  #allocation0 [shape = 'u32[]', space=smem, size = 0x4, offset = 0x4, fixed_abs, tag = 'smem constant byte address 0x4 - core index']
  #allocation1 [shape = 'u32[144,128]{1,0:T(1,128)}', space=vmem, size = 0x12000, scoped, tag = 'internal scratch']
  %s0 = inlined_call_operand.vmem [shape: bf16[2,32,1158], index: 0, kind: input, shape index: {}]
  %s1 = inlined_call_operand.vmem [shape: bf16[2,4,1158], index: 1, kind: input, shape index: {}]
  %s2 = inlined_call_operand.vmem [shape: bf16[4,32], index: 2, kind: input, shape index: {}]
  %s3 = inlined_call_operand.vmem [shape: f32[4,1158], index: 3, kind: input, shape index: {}]
  %s4 = inlined_call_operand.vmem [shape: bf16[4,72], index: 4, kind: input, shape index: {}]
  %s5 = inlined_call_operand.vmem [shape: f32[4,1], index: 5, kind: input, shape index: {}]
  %s6 = inlined_call_operand.vmem [shape: bf16[4,36], index: 6, kind: input, shape index: {}]
  %s7 = inlined_call_operand.vmem [shape: f32[4,1], index: 7, kind: input, shape index: {}]
  %s8 = inlined_call_operand.vmem [shape: f32[1,1088], index: 8, kind: input, shape index: {}]
  %s9 = inlined_call_operand.vmem [shape: f32[2,4,1088], index: 9, kind: output, shape index: {}]
  %s10 = sld [smem:[#allocation0]]
  $region69: #{unet_up_block_forward.1} parent=0
    _
  %s12 = ssub.s32 1, %s10
  %s13 = scalar_select 0, %s12, %s10
  loop: start=0, step=1, limit=4
  $region2: #{unet_up_block_forward.1} parent=0 // loop_pre_header
    _
  $region3: #{unet_up_block_forward.1} parent=0 // loop_header
    %s15 = sphi 0, %s19
    %p16 = scmp.ge.s32.totalorder %s15, 4
    %s25 = sphi 0, %s27
    %s28 = sphi 0, %s25
    %s29 = sphi 0, %s28
    %s45 = sphi 0, %s29
    %s51 = sphi 0, %s53
    %s54 = sphi 0, %s51
    %s55 = sphi 0, %s54
    %s71 = sphi 0, %s55
    %s75 = sphi 0, %s75
    %s77 = sphi 0, %s75
    %s78 = sphi 0, %s77
    %s92 = sphi 0, %s78
    %s96 = sphi 0, %s96
    %s98 = sphi 0, %s96
    %s99 = sphi 0, %s98
    %s113 = sphi 0, %s99
    %s117 = sphi 0, %s117
    %s119 = sphi 0, %s117
    %s120 = sphi 0, %s119
    %s134 = sphi 0, %s120
    %s138 = sphi 0, %s138
    %s140 = sphi 0, %s138
    %s141 = sphi 0, %s140
    %s155 = sphi 0, %s141
    %s159 = sphi 0, %s159
    %s161 = sphi 0, %s159
    %s162 = sphi 0, %s161
    %s176 = sphi 0, %s162
    %s180 = sphi 0, %s180
    %s182 = sphi 0, %s180
    %s183 = sphi 0, %s182
    %s197 = sphi 0, %s183
    %s201 = sphi 0, %s201
    %s203 = sphi 0, %s201
    %s204 = sphi 0, %s203
    %s218 = sphi 0, %s204
    %s224 = sphi 0, %s226
    %s227 = sphi 0, %s224
    %s228 = sphi 0, %s227
    %s244 = sphi 0, %s228
  $region4: #{unet_up_block_forward.1} parent=0 // loop_header_branch
    %18 = sbr.rel (%p16) target = $region8
  $region5: #{unet_up_block_forward.1} parent=0 // loop_body
    %s20 = ssub.s32 %s15, 1
    %s21 = ssub.s32 %s15, 2
    %s22 = sadd.s32 %s15, 1
    %s23 = ssub.s32 %s15, %s22
    %p24 = scmp.eq.s32.totalorder %s23, 0
    %s26 = sadd.s32 %s25, 1
    %s27 = scalar_select %p24, %s25, %s26
    %p30 = pneg %p24
    %p31 = scmp.eq.s32.totalorder %s15, 1
    %p32 = por %p30, %p31
    %p33 = scmp.ne.s32.totalorder %s25, %s28
    %p34 = scmp.eq.s32.totalorder %s15, 0
    %p35 = por %p33, %p34
    %p36 = scmp.ne.s32.totalorder %s25, %s28
    %p37 = scmp.eq.s32.totalorder %s20, 1
    %p38 = por %p36, %p37
    %p39 = scmp.ne.s32.totalorder %s28, %s29
    %p40 = scmp.eq.s32.totalorder %s20, 0
    %p41 = por %p39, %p40
    %p42 = scmp.ne.s32.totalorder %s28, %s29
    %p43 = scmp.eq.s32.totalorder %s21, 1
    %p44 = por %p42, %p43
    %p46 = scmp.ne.s32.totalorder %s29, %s45
    %p47 = scmp.eq.s32.totalorder %s21, 0
    %p48 = por %p46, %p47
    %s49 = ssub.s32 %s15, %s22
    %p50 = scmp.eq.s32.totalorder %s49, 0
    %s52 = sadd.s32 %s51, 1
    %s53 = scalar_select %p50, %s51, %s52
    %p56 = pneg %p50
    %p57 = scmp.eq.s32.totalorder %s15, 1
    %p58 = por %p56, %p57
    %p59 = scmp.ne.s32.totalorder %s51, %s54
    %p60 = scmp.eq.s32.totalorder %s15, 0
    %p61 = por %p59, %p60
    %p62 = scmp.ne.s32.totalorder %s51, %s54
    %p63 = scmp.eq.s32.totalorder %s20, 1
    %p64 = por %p62, %p63
    %p65 = scmp.ne.s32.totalorder %s54, %s55
    %p66 = scmp.eq.s32.totalorder %s20, 0
    %p67 = por %p65, %p66
    %p68 = scmp.ne.s32.totalorder %s54, %s55
    %p69 = scmp.eq.s32.totalorder %s21, 1
    %p70 = por %p68, %p69
    %p72 = scmp.ne.s32.totalorder %s55, %s71
    %p73 = scmp.eq.s32.totalorder %s21, 0
    %p74 = por %p72, %p73
    %s76 = sadd.s32 %s75, 1
    %p79 = scmp.eq.s32.totalorder %s15, 1
    %p80 = scmp.ne.s32.totalorder %s75, %s77
    %p81 = scmp.eq.s32.totalorder %s15, 0
    %p82 = por %p80, %p81
    %p83 = scmp.ne.s32.totalorder %s75, %s77
    %p84 = scmp.eq.s32.totalorder %s20, 1
    %p85 = por %p83, %p84
    %p86 = scmp.ne.s32.totalorder %s77, %s78
    %p87 = scmp.eq.s32.totalorder %s20, 0
    %p88 = por %p86, %p87
    %p89 = scmp.ne.s32.totalorder %s77, %s78
    %p90 = scmp.eq.s32.totalorder %s21, 1
    %p91 = por %p89, %p90
    %p93 = scmp.ne.s32.totalorder %s78, %s92
    %p94 = scmp.eq.s32.totalorder %s21, 0
    %p95 = por %p93, %p94
    %s97 = sadd.s32 %s96, 1
    %p100 = scmp.eq.s32.totalorder %s15, 1
    %p101 = scmp.ne.s32.totalorder %s96, %s98
    %p102 = scmp.eq.s32.totalorder %s15, 0
    %p103 = por %p101, %p102
    %p104 = scmp.ne.s32.totalorder %s96, %s98
    %p105 = scmp.eq.s32.totalorder %s20, 1
    %p106 = por %p104, %p105
    %p107 = scmp.ne.s32.totalorder %s98, %s99
    %p108 = scmp.eq.s32.totalorder %s20, 0
    %p109 = por %p107, %p108
    %p110 = scmp.ne.s32.totalorder %s98, %s99
    %p111 = scmp.eq.s32.totalorder %s21, 1
    %p112 = por %p110, %p111
    %p114 = scmp.ne.s32.totalorder %s99, %s113
    %p115 = scmp.eq.s32.totalorder %s21, 0
    %p116 = por %p114, %p115
    %s118 = sadd.s32 %s117, 1
    %p121 = scmp.eq.s32.totalorder %s15, 1
    %p122 = scmp.ne.s32.totalorder %s117, %s119
    %p123 = scmp.eq.s32.totalorder %s15, 0
    %p124 = por %p122, %p123
    %p125 = scmp.ne.s32.totalorder %s117, %s119
    %p126 = scmp.eq.s32.totalorder %s20, 1
    %p127 = por %p125, %p126
    %p128 = scmp.ne.s32.totalorder %s119, %s120
    %p129 = scmp.eq.s32.totalorder %s20, 0
    %p130 = por %p128, %p129
    %p131 = scmp.ne.s32.totalorder %s119, %s120
    %p132 = scmp.eq.s32.totalorder %s21, 1
    %p133 = por %p131, %p132
    %p135 = scmp.ne.s32.totalorder %s120, %s134
    %p136 = scmp.eq.s32.totalorder %s21, 0
    %p137 = por %p135, %p136
    %s139 = sadd.s32 %s138, 1
    %p142 = scmp.eq.s32.totalorder %s15, 1
    %p143 = scmp.ne.s32.totalorder %s138, %s140
    %p144 = scmp.eq.s32.totalorder %s15, 0
    %p145 = por %p143, %p144
    %p146 = scmp.ne.s32.totalorder %s138, %s140
    %p147 = scmp.eq.s32.totalorder %s20, 1
    %p148 = por %p146, %p147
    %p149 = scmp.ne.s32.totalorder %s140, %s141
    %p150 = scmp.eq.s32.totalorder %s20, 0
    %p151 = por %p149, %p150
    %p152 = scmp.ne.s32.totalorder %s140, %s141
    %p153 = scmp.eq.s32.totalorder %s21, 1
    %p154 = por %p152, %p153
    %p156 = scmp.ne.s32.totalorder %s141, %s155
    %p157 = scmp.eq.s32.totalorder %s21, 0
    %p158 = por %p156, %p157
    %s160 = sadd.s32 %s159, 1
    %p163 = scmp.eq.s32.totalorder %s15, 1
    %p164 = scmp.ne.s32.totalorder %s159, %s161
    %p165 = scmp.eq.s32.totalorder %s15, 0
    %p166 = por %p164, %p165
    %p167 = scmp.ne.s32.totalorder %s159, %s161
    %p168 = scmp.eq.s32.totalorder %s20, 1
    %p169 = por %p167, %p168
    %p170 = scmp.ne.s32.totalorder %s161, %s162
    %p171 = scmp.eq.s32.totalorder %s20, 0
    %p172 = por %p170, %p171
    %p173 = scmp.ne.s32.totalorder %s161, %s162
    %p174 = scmp.eq.s32.totalorder %s21, 1
    %p175 = por %p173, %p174
    %p177 = scmp.ne.s32.totalorder %s162, %s176
    %p178 = scmp.eq.s32.totalorder %s21, 0
    %p179 = por %p177, %p178
    %s181 = sadd.s32 %s180, 1
    %p184 = scmp.eq.s32.totalorder %s15, 1
    %p185 = scmp.ne.s32.totalorder %s180, %s182
    %p186 = scmp.eq.s32.totalorder %s15, 0
    %p187 = por %p185, %p186
    %p188 = scmp.ne.s32.totalorder %s180, %s182
    %p189 = scmp.eq.s32.totalorder %s20, 1
    %p190 = por %p188, %p189
    %p191 = scmp.ne.s32.totalorder %s182, %s183
    %p192 = scmp.eq.s32.totalorder %s20, 0
    %p193 = por %p191, %p192
    %p194 = scmp.ne.s32.totalorder %s182, %s183
    %p195 = scmp.eq.s32.totalorder %s21, 1
    %p196 = por %p194, %p195
    %p198 = scmp.ne.s32.totalorder %s183, %s197
    %p199 = scmp.eq.s32.totalorder %s21, 0
    %p200 = por %p198, %p199
    %s202 = sadd.s32 %s201, 1
    %p205 = scmp.eq.s32.totalorder %s15, 1
    %p206 = scmp.ne.s32.totalorder %s201, %s203
    %p207 = scmp.eq.s32.totalorder %s15, 0
    %p208 = por %p206, %p207
    %p209 = scmp.ne.s32.totalorder %s201, %s203
    %p210 = scmp.eq.s32.totalorder %s20, 1
    %p211 = por %p209, %p210
    %p212 = scmp.ne.s32.totalorder %s203, %s204
    %p213 = scmp.eq.s32.totalorder %s20, 0
    %p214 = por %p212, %p213
    %p215 = scmp.ne.s32.totalorder %s203, %s204
    %p216 = scmp.eq.s32.totalorder %s21, 1
    %p217 = por %p215, %p216
    %p219 = scmp.ne.s32.totalorder %s204, %s218
    %p220 = scmp.eq.s32.totalorder %s21, 0
    %p221 = por %p219, %p220
    %s222 = ssub.s32 %s15, %s22
    %p223 = scmp.eq.s32.totalorder %s222, 0
    %s225 = sadd.s32 %s224, 1
    %s226 = scalar_select %p223, %s224, %s225
    %p229 = pneg %p223
    %p230 = scmp.eq.s32.totalorder %s15, 1
    %p231 = por %p229, %p230
    %p232 = scmp.ne.s32.totalorder %s224, %s227
    %p233 = scmp.eq.s32.totalorder %s15, 0
    %p234 = por %p232, %p233
    %p235 = scmp.ne.s32.totalorder %s224, %s227
    %p236 = scmp.eq.s32.totalorder %s20, 1
    %p237 = por %p235, %p236
    %p238 = scmp.ne.s32.totalorder %s227, %s228
    %p239 = scmp.eq.s32.totalorder %s20, 0
    %p240 = por %p238, %p239
    %p241 = scmp.ne.s32.totalorder %s227, %s228
    %p242 = scmp.eq.s32.totalorder %s21, 1
    %p243 = por %p241, %p242
    %p245 = scmp.ne.s32.totalorder %s228, %s244
    %p246 = scmp.eq.s32.totalorder %s21, 0
    %p247 = por %p245, %p246
    %p248 = scmp.le.s32.totalorder 1, %s15
    %p249 = scmp.lt.s32.totalorder %s15, 3
    %p250 = pnand %p248, %p249
    %p251 = pneg %p250
    // Predicated region
    $region9: #{unet_up_block_forward.1} parent=5 // pred_check
      _
    $region10: #{unet_up_block_forward.1} parent=5 // pred_check_branch
      %253 = sbr.rel (%p250) target = $region12
    $region11: #{unet_up_block_forward.1} parent=5 // pred_region
      %s254 = ssub.s32 %s15, 1
      // Predicated region
      $region13: #{unet_up_block_forward.1} parent=11 // pred_check
        %p255 = pneg %p88
      $region14: #{unet_up_block_forward.1} parent=11 // pred_check_branch
        %257 = sbr.rel (%p255) target = $region16
      $region15: #{unet_up_block_forward.1} parent=11 // pred_region
        _
      $region16: #{unet_up_block_forward.1} parent=11 // pred_fallthru
        _
      // Predicated region
      $region17: #{unet_up_block_forward.1} parent=11 // pred_check
        %p258 = pneg %p109
      $region18: #{unet_up_block_forward.1} parent=11 // pred_check_branch
        %260 = sbr.rel (%p258) target = $region20
      $region19: #{unet_up_block_forward.1} parent=11 // pred_region
        _
      $region20: #{unet_up_block_forward.1} parent=11 // pred_fallthru
        _
      // Predicated region
      $region21: #{unet_up_block_forward.1} parent=11 // pred_check
        %p261 = pneg %p130
      $region22: #{unet_up_block_forward.1} parent=11 // pred_check_branch
        %263 = sbr.rel (%p261) target = $region24
      $region23: #{unet_up_block_forward.1} parent=11 // pred_region
        _
      $region24: #{unet_up_block_forward.1} parent=11 // pred_fallthru
        _
      // Predicated region
      $region25: #{unet_up_block_forward.1} parent=11 // pred_check
        %p264 = pneg %p151
      $region26: #{unet_up_block_forward.1} parent=11 // pred_check_branch
        %266 = sbr.rel (%p264) target = $region28
      $region27: #{unet_up_block_forward.1} parent=11 // pred_region
        _
      $region28: #{unet_up_block_forward.1} parent=11 // pred_fallthru
        _
      // Predicated region
      $region29: #{unet_up_block_forward.1} parent=11 // pred_check
        %p267 = pneg %p172
      $region30: #{unet_up_block_forward.1} parent=11 // pred_check_branch
        %269 = sbr.rel (%p267) target = $region32
      $region31: #{unet_up_block_forward.1} parent=11 // pred_region
        _
      $region32: #{unet_up_block_forward.1} parent=11 // pred_fallthru
        _
      // Predicated region
      $region33: #{unet_up_block_forward.1} parent=11 // pred_check
        %p270 = pneg %p193
      $region34: #{unet_up_block_forward.1} parent=11 // pred_check_branch
        %272 = sbr.rel (%p270) target = $region36
      $region35: #{unet_up_block_forward.1} parent=11 // pred_region
        _
      $region36: #{unet_up_block_forward.1} parent=11 // pred_fallthru
        _
      // Predicated region
      $region37: #{unet_up_block_forward.1} parent=11 // pred_check
        %p273 = pneg %p214
      $region38: #{unet_up_block_forward.1} parent=11 // pred_check_branch
        %275 = sbr.rel (%p273) target = $region40
      $region39: #{unet_up_block_forward.1} parent=11 // pred_region
        _
      $region40: #{unet_up_block_forward.1} parent=11 // pred_fallthru
        _
    $region12: #{unet_up_block_forward.1} parent=5 // pred_fallthru
      _
    %p276 = scmp.lt.s32.totalorder %s15, 2
    // Predicated region
    $region41: #{unet_up_block_forward.1} parent=5 // pred_check
      %p277 = pneg %p276
    $region42: #{unet_up_block_forward.1} parent=5 // pred_check_branch
      %279 = sbr.rel (%p277) target = $region44
    $region43: #{unet_up_block_forward.1} parent=5 // pred_region
      // Predicated region
      $region45: #{unet_up_block_forward.1} parent=43 // pred_check
        %p280 = pneg %p35
      $region46: #{unet_up_block_forward.1} parent=43 // pred_check_branch
        %282 = sbr.rel (%p280) target = $region48
      $region47: #{unet_up_block_forward.1} parent=43 // pred_region
        %p283 = scmp.lt.s32.totalorder %s15, 1
        %s284 = scalar_select %p283, %s15, 1
        %s285 = smul.addr %s284, 40
        %s286 = smul.addr %s285, 4
        %s287 = scalar_lea.vmem %s0, %s286
      $region48: #{unet_up_block_forward.1} parent=43 // pred_fallthru
        _
      // Predicated region
      $region49: #{unet_up_block_forward.1} parent=43 // pred_check
        %p288 = pneg %p61
      $region50: #{unet_up_block_forward.1} parent=43 // pred_check_branch
        %290 = sbr.rel (%p288) target = $region52
      $region51: #{unet_up_block_forward.1} parent=43 // pred_region
        %p291 = scmp.lt.s32.totalorder %s15, 1
        %s292 = scalar_select %p291, %s15, 1
        %s293 = smul.addr %s292, 10
        %s294 = smul.addr %s293, 2
        %s295 = scalar_lea.vmem %s1, %s294
      $region52: #{unet_up_block_forward.1} parent=43 // pred_fallthru
        _
    $region44: #{unet_up_block_forward.1} parent=5 // pred_fallthru
      _
    %p296 = scmp.le.s32.totalorder 1, %s15
    %p297 = scmp.lt.s32.totalorder %s15, 3
    %p298 = pnand %p296, %p297
    %p299 = pneg %p298
    // Predicated region
    $region53: #{unet_up_block_forward.1} parent=5 // pred_check
      _
    $region54: #{unet_up_block_forward.1} parent=5 // pred_check_branch
      %301 = sbr.rel (%p298) target = $region56
    $region55: #{unet_up_block_forward.1} parent=5 // pred_region
      %s302 = ssub.s32 %s15, 1
      %p303 = scmp.lt.s32.totalorder %s20, 1
      %s304 = scalar_select %p303, %s20, 1
      %s305 = smul.addr %s304, 40
      %s306 = smul.addr %s305, 4
      %s307 = scalar_lea.vmem %s0, %s306
      %p308 = pneg %p41
      %p309 = pneg %p38
      %p310 = scmp.lt.s32.totalorder %s20, 1
      %s311 = scalar_select %p310, %s20, 1
      %s312 = smul.addr %s311, 10
      %s313 = smul.addr %s312, 2
      %s314 = scalar_lea.vmem %s1, %s313
      %p315 = pneg %p67
      %p316 = pneg %p64
      %p317 = pneg %p88
      %p318 = pneg %p85
      %p319 = pneg %p109
      %p320 = pneg %p106
      %p321 = pneg %p130
      %p322 = pneg %p127
      %p323 = pneg %p151
      %p324 = pneg %p148
      %p325 = pneg %p172
      %p326 = pneg %p169
      %p327 = pneg %p193
      %p328 = pneg %p190
      %p329 = pneg %p214
      %p330 = pneg %p211
      %p331 = pneg %p240
      %p332 = pneg %p237
      %p333 = scmp.lt.s32.totalorder %s20, 1
      %s334 = scalar_select %p333, %s20, 1
      %s335 = smul.addr %s334, 9
      %s336 = smul.addr %s335, 4
      %s337 = scalar_lea.vmem %s9, %s336
      %p338 = scmp.lt.s32.totalorder %s20, 1
      %s339 = scalar_select %p338, %s20, 1
      %s340 = smul.addr %s339, 40
      %s341 = smul.addr %s340, 4
      %s342 = scalar_lea.vmem %s0, %s341
      %p343 = scmp.lt.s32.totalorder %s20, 1
      %s344 = scalar_select %p343, %s20, 1
      %s345 = smul.addr %s344, 10
      %s346 = smul.addr %s345, 2
      %s347 = scalar_lea.vmem %s1, %s346
      %p348 = scmp.lt.s32.totalorder %s20, 1
      %s349 = scalar_select %p348, %s20, 1
      %s350 = smul.addr %s349, 9
      %s351 = smul.addr %s350, 4
      %s352 = scalar_lea.vmem %s9, %s351
      %v354 = vld [vmem:[%s2] sm:$0x3]
      %v355 = vld [vmem:[%s342] sm:$0xff]
      %v356 = vld [vmem:[%s342 + $0x8] sm:$0xff]
      %v357 = vld [vmem:[%s342 + $0x10] sm:$0xff]
      %v358 = vld [vmem:[%s342 + $0x18] sm:$0xff]
      %v359 = vld [vmem:[%s342 + $0x20] sm:$0xff]
      %v360 = vld [vmem:[%s342 + $0x28] sm:$0xff]
      %v361 = vld [vmem:[%s342 + $0x30] sm:$0xff]
      %v362 = vld [vmem:[%s342 + $0x38] sm:$0xff]
      %v363 = vld [vmem:[%s342 + $0x40] sm:$0xff]
      %v364 = vld [vmem:[%s342 + $0x48] sm:$0xff]
      %v365 = vld [vmem:[%s342 + $0x50] sm:$0xff]
      %v366 = vld [vmem:[%s342 + $0x58] sm:$0xff]
      %v367 = vld [vmem:[%s342 + $0x60] sm:$0xff]
      %v368 = vld [vmem:[%s342 + $0x68] sm:$0xff]
      %v369 = vld [vmem:[%s342 + $0x70] sm:$0xff]
      %v370 = vld [vmem:[%s342 + $0x78] sm:$0xff]
      %v371 = vld [vmem:[%s342 + $0x80] sm:$0xff]
      %v372 = vld [vmem:[%s342 + $0x88] sm:$0xff]
      %v373 = vld [vmem:[%s342 + $0x90] sm:$0xff]
      %v374 = vld [vmem:[%s342 + $0x98] sm:$0xff]
      %v375 = vld [vmem:[%s3] sm:$0xff]
      %v376 = vld [vmem:[%s3 + $0x8] sm:$0xff]
      %v377 = vld [vmem:[%s3 + $0x10] sm:$0xff]
      %v378 = vld [vmem:[%s3 + $0x18] sm:$0xff]
      %v379 = vld [vmem:[%s3 + $0x20] sm:$0xff]
      %v400 = vunpack.c.l.b16 %v355
      %v401 = vunpack.c.h.b16 %v355
      %v402 = vunpack.c.l.b16 %v356
      %v403 = vunpack.c.h.b16 %v356
      %v404 = vunpack.c.l.b16 %v357
      %v405 = vunpack.c.h.b16 %v357
      %v406 = vunpack.c.l.b16 %v358
      %v407 = vunpack.c.h.b16 %v358
      %v408 = vunpack.c.l.b16 %v359
      %v409 = vunpack.c.h.b16 %v359
      %v410 = vunpack.c.l.b16 %v360
      %v411 = vunpack.c.h.b16 %v360
      %v412 = vunpack.c.l.b16 %v361
      %v413 = vunpack.c.h.b16 %v361
      %v414 = vunpack.c.l.b16 %v362
      %v415 = vunpack.c.h.b16 %v362
      %v416 = vunpack.c.l.b16 %v363
      %v417 = vunpack.c.h.b16 %v363
      %v418 = vunpack.c.l.b16 %v364
      %v419 = vunpack.c.h.b16 %v364
      %v420 = vunpack.c.l.b16 %v365
      %v421 = vunpack.c.h.b16 %v365
      %v422 = vunpack.c.l.b16 %v366
      %v423 = vunpack.c.h.b16 %v366
      %v424 = vunpack.c.l.b16 %v367
      %v425 = vunpack.c.h.b16 %v367
      %v426 = vunpack.c.l.b16 %v368
      %v427 = vunpack.c.h.b16 %v368
      %v428 = vunpack.c.l.b16 %v369
      %v429 = vunpack.c.h.b16 %v369
      %v430 = vunpack.c.l.b16 %v370
      %v431 = vunpack.c.h.b16 %v370
      %v432 = vunpack.c.l.b16 %v371
      %v433 = vunpack.c.h.b16 %v371
      %v434 = vunpack.c.l.b16 %v372
      %v435 = vunpack.c.h.b16 %v372
      %v436 = vunpack.c.l.b16 %v373
      %v437 = vunpack.c.h.b16 %v373
      %v438 = vunpack.c.l.b16 %v374
      %v439 = vunpack.c.h.b16 %v374
      %v440 = vpack.c.b16 %v410, %v400
      %v441 = vpack.c.b16 %v411, %v401
      %v442 = vpack.c.b16 %v412, %v402
      %v443 = vpack.c.b16 %v413, %v403
      %v444 = vpack.c.b16 %v414, %v404
      %v445 = vpack.c.b16 %v415, %v405
      %v446 = vpack.c.b16 %v416, %v406
      %v447 = vpack.c.b16 %v417, %v407
      %v448 = vpack.c.b16 %v418, %v408
      %v449 = vpack.c.b16 %v419, %v409
      %v450 = vpack.c.b16 %v430, %v420
      %v451 = vpack.c.b16 %v431, %v421
      %v452 = vpack.c.b16 %v432, %v422
      %v453 = vpack.c.b16 %v433, %v423
      %v454 = vpack.c.b16 %v434, %v424
      %v455 = vpack.c.b16 %v435, %v425
      %v456 = vpack.c.b16 %v436, %v426
      %v457 = vpack.c.b16 %v437, %v427
      %v458 = vpack.c.b16 %v438, %v428
      %v459 = vpack.c.b16 %v439, %v429
      %v485 = vcombine.high %v375, %v375
      %v486 = vcombine.high %v376, %v376
      %v487 = vcombine.high %v377, %v377
      %v488 = vcombine.high %v378, %v378
      %v489 = vcombine.high %v379, %v379
      %vm495 = vcmask 261120
      %v497 = vsel %vm495, %v354, 0
      %499 = vmatprep.subr.bf16.mxu0 %v441
      %500 = vmatpush1.bf16.msra.mxu0 %v440
      %501 = vmatprep.subr.bf16.mxu0 %v451
      %502 = vmatpush1.bf16.msra.mxu0 %v450
      %503 = vmatprep.subr.bf16.mxu0 0
      %504 = vmatpush1.bf16.msra.mxu0 0
      %505 = vmatprep.subr.bf16.mxu0 0
      %506 = vmatpush1.bf16.msra.mxu0 0
      %507 = vmatprep.subr.bf16.mxu0 0
      %508 = vmatpush1.bf16.msra.mxu0 0
      %509 = vmatprep.subr.bf16.mxu0 0
      %510 = vmatpush1.bf16.msra.mxu0 0
      %511 = vmatprep.subr.bf16.mxu0 0
      %512 = vmatpush1.bf16.msra.mxu0 0
      %513 = vmatprep.subr.bf16.mxu0 0
      %514 = vmatpush1.bf16.msra.mxu0 0
      %515 = vmatprep.subr.bf16.mxu0 0
      %516 = vmatpush1.bf16.msra.mxu0 0
      %517 = vmatprep.subr.bf16.mxu0 0
      %518 = vmatpush1.bf16.msra.mxu0 0
      %519 = vmatprep.subr.bf16.mxu0 0
      %520 = vmatpush1.bf16.msra.mxu0 0
      %521 = vmatprep.subr.bf16.mxu0 0
      %522 = vmatpush1.bf16.msra.mxu0 0
      %523 = vmatprep.subr.bf16.mxu0 0
      %524 = vmatpush1.bf16.msra.mxu0 0
      %525 = vmatprep.subr.bf16.mxu0 0
      %526 = vmatpush1.bf16.msra.mxu0 0
      %527 = vmatprep.subr.bf16.mxu0 0
      %528 = vmatpush1.bf16.msra.mxu0 0
      %529 = vmatprep.subr.bf16.mxu0 0
      %530 = vmatpush1.bf16.msra.mxu0 0
      %531 = vmatprep.mubr.bf16.mxu0 0
      %532 = vmatmul.mubr.bf16.gmra.mrb[0].mxu0 %v497
      %v533 = vpop.f32.mrb[0].mxu0
      %v534 = vadd.f32 %v375, %v533
      %v535 = vpop.f32.mrb[0].mxu0
      %v536 = vadd.f32 %v485, %v535
      %v537 = vpop.f32.mrb[0].mxu0
      %v538 = vpop.f32.mrb[0].mxu0
      %539 = vdwg.mxu0
      %540 = vmatprep.subr.bf16.mxu0 %v443
      %541 = vmatpush1.bf16.msra.mxu0 %v442
      %542 = vmatprep.subr.bf16.mxu0 %v453
      %543 = vmatpush1.bf16.msra.mxu0 %v452
      %544 = vmatprep.subr.bf16.mxu0 0
      %545 = vmatpush1.bf16.msra.mxu0 0
      %546 = vmatprep.subr.bf16.mxu0 0
      %547 = vmatpush1.bf16.msra.mxu0 0
      %548 = vmatprep.subr.bf16.mxu0 0
      %549 = vmatpush1.bf16.msra.mxu0 0
      %550 = vmatprep.subr.bf16.mxu0 0
      %551 = vmatpush1.bf16.msra.mxu0 0
      %552 = vmatprep.subr.bf16.mxu0 0
      %553 = vmatpush1.bf16.msra.mxu0 0
      %554 = vmatprep.subr.bf16.mxu0 0
      %555 = vmatpush1.bf16.msra.mxu0 0
      %556 = vmatprep.subr.bf16.mxu0 0
      %557 = vmatpush1.bf16.msra.mxu0 0
      %558 = vmatprep.subr.bf16.mxu0 0
      %559 = vmatpush1.bf16.msra.mxu0 0
      %560 = vmatprep.subr.bf16.mxu0 0
      %561 = vmatpush1.bf16.msra.mxu0 0
      %562 = vmatprep.subr.bf16.mxu0 0
      %563 = vmatpush1.bf16.msra.mxu0 0
      %564 = vmatprep.subr.bf16.mxu0 0
      %565 = vmatpush1.bf16.msra.mxu0 0
      %566 = vmatprep.subr.bf16.mxu0 0
      %567 = vmatpush1.bf16.msra.mxu0 0
      %568 = vmatprep.subr.bf16.mxu0 0
      %569 = vmatpush1.bf16.msra.mxu0 0
      %570 = vmatprep.subr.bf16.mxu0 0
      %571 = vmatpush1.bf16.msra.mxu0 0
      %572 = vmatprep.mubr.bf16.mxu0 0
      %573 = vmatmul.mubr.bf16.gmra.mrb[0].mxu0 %v497
      %v574 = vpop.f32.mrb[0].mxu0
      %v575 = vadd.f32 %v376, %v574
      %v576 = vpop.f32.mrb[0].mxu0
      %v577 = vadd.f32 %v486, %v576
      %v578 = vpop.f32.mrb[0].mxu0
      %v579 = vpop.f32.mrb[0].mxu0
      %580 = vdwg.mxu0
      %581 = vmatprep.subr.bf16.mxu0 %v445
      %582 = vmatpush1.bf16.msra.mxu0 %v444
      %583 = vmatprep.subr.bf16.mxu0 %v455
      %584 = vmatpush1.bf16.msra.mxu0 %v454
      %585 = vmatprep.subr.bf16.mxu0 0
      %586 = vmatpush1.bf16.msra.mxu0 0
      %587 = vmatprep.subr.bf16.mxu0 0
      %588 = vmatpush1.bf16.msra.mxu0 0
      %589 = vmatprep.subr.bf16.mxu0 0
      %590 = vmatpush1.bf16.msra.mxu0 0
      %591 = vmatprep.subr.bf16.mxu0 0
      %592 = vmatpush1.bf16.msra.mxu0 0
      %593 = vmatprep.subr.bf16.mxu0 0
      %594 = vmatpush1.bf16.msra.mxu0 0
      %595 = vmatprep.subr.bf16.mxu0 0
      %596 = vmatpush1.bf16.msra.mxu0 0
      %597 = vmatprep.subr.bf16.mxu0 0
      %598 = vmatpush1.bf16.msra.mxu0 0
      %599 = vmatprep.subr.bf16.mxu0 0
      %600 = vmatpush1.bf16.msra.mxu0 0
      %601 = vmatprep.subr.bf16.mxu0 0
      %602 = vmatpush1.bf16.msra.mxu0 0
      %603 = vmatprep.subr.bf16.mxu0 0
      %604 = vmatpush1.bf16.msra.mxu0 0
      %605 = vmatprep.subr.bf16.mxu0 0
      %606 = vmatpush1.bf16.msra.mxu0 0
      %607 = vmatprep.subr.bf16.mxu0 0
      %608 = vmatpush1.bf16.msra.mxu0 0
      %609 = vmatprep.subr.bf16.mxu0 0
      %610 = vmatpush1.bf16.msra.mxu0 0
      %611 = vmatprep.subr.bf16.mxu0 0
      %612 = vmatpush1.bf16.msra.mxu0 0
      %613 = vmatprep.mubr.bf16.mxu0 0
      %614 = vmatmul.mubr.bf16.gmra.mrb[0].mxu0 %v497
      %v615 = vpop.f32.mrb[0].mxu0
      %v616 = vadd.f32 %v377, %v615
      %v617 = vpop.f32.mrb[0].mxu0
      %v618 = vadd.f32 %v487, %v617
      %v619 = vpop.f32.mrb[0].mxu0
      %v620 = vpop.f32.mrb[0].mxu0
      %621 = vdwg.mxu0
      %622 = vmatprep.subr.bf16.mxu0 %v447
      %623 = vmatpush1.bf16.msra.mxu0 %v446
      %624 = vmatprep.subr.bf16.mxu0 %v457
      %625 = vmatpush1.bf16.msra.mxu0 %v456
      %626 = vmatprep.subr.bf16.mxu0 0
      %627 = vmatpush1.bf16.msra.mxu0 0
      %628 = vmatprep.subr.bf16.mxu0 0
      %629 = vmatpush1.bf16.msra.mxu0 0
      %630 = vmatprep.subr.bf16.mxu0 0
      %631 = vmatpush1.bf16.msra.mxu0 0
      %632 = vmatprep.subr.bf16.mxu0 0
      %633 = vmatpush1.bf16.msra.mxu0 0
      %634 = vmatprep.subr.bf16.mxu0 0
      %635 = vmatpush1.bf16.msra.mxu0 0
      %636 = vmatprep.subr.bf16.mxu0 0
      %637 = vmatpush1.bf16.msra.mxu0 0
      %638 = vmatprep.subr.bf16.mxu0 0
      %639 = vmatpush1.bf16.msra.mxu0 0
      %640 = vmatprep.subr.bf16.mxu0 0
      %641 = vmatpush1.bf16.msra.mxu0 0
      %642 = vmatprep.subr.bf16.mxu0 0
      %643 = vmatpush1.bf16.msra.mxu0 0
      %644 = vmatprep.subr.bf16.mxu0 0
      %645 = vmatpush1.bf16.msra.mxu0 0
      %646 = vmatprep.subr.bf16.mxu0 0
      %647 = vmatpush1.bf16.msra.mxu0 0
      %648 = vmatprep.subr.bf16.mxu0 0
      %649 = vmatpush1.bf16.msra.mxu0 0
      %650 = vmatprep.subr.bf16.mxu0 0
      %651 = vmatpush1.bf16.msra.mxu0 0
      %652 = vmatprep.subr.bf16.mxu0 0
      %653 = vmatpush1.bf16.msra.mxu0 0
      %654 = vmatprep.mubr.bf16.mxu0 0
      %655 = vmatmul.mubr.bf16.gmra.mrb[0].mxu0 %v497
      %v656 = vpop.f32.mrb[0].mxu0
      %v657 = vadd.f32 %v378, %v656
      %v658 = vpop.f32.mrb[0].mxu0
      %v659 = vadd.f32 %v488, %v658
      %v660 = vpop.f32.mrb[0].mxu0
      %v661 = vpop.f32.mrb[0].mxu0
      %662 = vdwg.mxu0
      %663 = vmatprep.subr.bf16.mxu0 %v449
      %664 = vmatpush1.bf16.msra.mxu0 %v448
      %665 = vmatprep.subr.bf16.mxu0 %v459
      %666 = vmatpush1.bf16.msra.mxu0 %v458
      %667 = vmatprep.subr.bf16.mxu0 0
      %668 = vmatpush1.bf16.msra.mxu0 0
      %669 = vmatprep.subr.bf16.mxu0 0
      %670 = vmatpush1.bf16.msra.mxu0 0
      %671 = vmatprep.subr.bf16.mxu0 0
      %672 = vmatpush1.bf16.msra.mxu0 0
      %673 = vmatprep.subr.bf16.mxu0 0
      %674 = vmatpush1.bf16.msra.mxu0 0
      %675 = vmatprep.subr.bf16.mxu0 0
      %676 = vmatpush1.bf16.msra.mxu0 0
      %677 = vmatprep.subr.bf16.mxu0 0
      %678 = vmatpush1.bf16.msra.mxu0 0
      %679 = vmatprep.subr.bf16.mxu0 0
      %680 = vmatpush1.bf16.msra.mxu0 0
      %681 = vmatprep.subr.bf16.mxu0 0
      %682 = vmatpush1.bf16.msra.mxu0 0
      %683 = vmatprep.subr.bf16.mxu0 0
      %684 = vmatpush1.bf16.msra.mxu0 0
      %685 = vmatprep.subr.bf16.mxu0 0
      %686 = vmatpush1.bf16.msra.mxu0 0
      %687 = vmatprep.subr.bf16.mxu0 0
      %688 = vmatpush1.bf16.msra.mxu0 0
      %689 = vmatprep.subr.bf16.mxu0 0
      %690 = vmatpush1.bf16.msra.mxu0 0
      %691 = vmatprep.subr.bf16.mxu0 0
      %692 = vmatpush1.bf16.msra.mxu0 0
      %693 = vmatprep.subr.bf16.mxu0 0
      %694 = vmatpush1.bf16.msra.mxu0 0
      %695 = vmatprep.mubr.bf16.mxu0 0
      %696 = vmatmul.mubr.bf16.gmra.mrb[0].mxu0 %v497
      %v697 = vpop.f32.mrb[0].mxu0
      %v698 = vadd.f32 %v379, %v697
      %v699 = vpop.f32.mrb[0].mxu0
      %v700 = vadd.f32 %v489, %v699
      %v701 = vpop.f32.mrb[0].mxu0
      %v702 = vpop.f32.mrb[0].mxu0
      %703 = vdwg.mxu0
      %v704 = vpack.c.bf16 %v534, %v534
      %v705 = vpack.c.bf16 %v536, %v536
      %v706 = vpack.c.bf16 %v575, %v575
      %v707 = vpack.c.bf16 %v577, %v577
      %v708 = vpack.c.bf16 %v616, %v616
      %v709 = vpack.c.bf16 %v618, %v618
      %v710 = vpack.c.bf16 %v657, %v657
      %v711 = vpack.c.bf16 %v659, %v659
      %v712 = vpack.c.bf16 %v698, %v698
      %v713 = vpack.c.bf16 %v700, %v700
      %v714 = vld [vmem:[%s347] sm:$0xff]
      %v715 = vld [vmem:[%s347 + $0x8] sm:$0xff]
      %v716 = vld [vmem:[%s347 + $0x10] sm:$0xf]
      %v720 = vcombine.low %v714, %v714
      %v722 = vunpack.c.l.s4 1983009808
      %v723 = vunpack.c.0.s8 %v722
      %v724 = vlaneseq
      %v725 = vshrl.u32 %v724, 7
      %v726 = vsub.s32 %v723, %v725
      %v727 = vrot.slane %v720, %v726
      %v729 = vunpack.c.l.s4 1983009808
      %v730 = vunpack.c.0.s8 %v729
      %v731 = vlaneseq
      %v732 = vshrl.u32 %v731, 7
      %v733 = vsub.s32 %v730, %v732
      %v734 = vrot.slane %v714, %v733
      %v735 = vcombine.high %v727, %v727
      %v736 = vcombine.high %v734, %v734
      %v737 = vcombine.low %v715, %v715
      %v739 = vunpack.c.l.s4 1983009808
      %v740 = vunpack.c.0.s8 %v739
      %v741 = vlaneseq
      %v742 = vshrl.u32 %v741, 7
      %v743 = vsub.s32 %v740, %v742
      %v744 = vrot.slane %v737, %v743
      %v746 = vunpack.c.l.s4 1983009808
      %v747 = vunpack.c.0.s8 %v746
      %v748 = vlaneseq
      %v749 = vshrl.u32 %v748, 7
      %v750 = vsub.s32 %v747, %v749
      %v751 = vrot.slane %v715, %v750
      %v752 = vcombine.high %v744, %v744
      %v753 = vcombine.high %v751, %v751
      %v754 = vcombine.low %v716, %v716
      %v756 = vunpack.c.l.s4 1983009808
      %v757 = vunpack.c.0.s8 %v756
      %v758 = vlaneseq
      %v759 = vshrl.u32 %v758, 7
      %v760 = vsub.s32 %v757, %v759
      %v761 = vrot.slane %v754, %v760
      %v762 = vcombine.high %v761, %v761
      %vm763 = vcmask 1041408
      %v766 = vsel %vm763, %v704, %v727
      %v769 = vsel %vm763, %v705, %v735
      %v772 = vsel %vm763, %v706, %v734
      %v775 = vsel %vm763, %v707, %v736
      %v778 = vsel %vm763, %v708, %v744
      %v781 = vsel %vm763, %v709, %v752
      %v784 = vsel %vm763, %v710, %v751
      %v787 = vsel %vm763, %v711, %v753
      %v790 = vsel %vm763, %v712, %v761
      %v793 = vsel %vm763, %v713, %v762
      %v803 = vrot.slane %v766, 4
      %v804 = vrot.slane %v769, 4
      %v805 = vrot.slane %v772, 4
      %v806 = vrot.slane %v775, 4
      %v807 = vrot.slane %v778, 4
      %v808 = vrot.slane %v781, 4
      %v809 = vrot.slane %v784, 4
      %v810 = vrot.slane %v787, 4
      %v811 = vrot.slane %v790, 4
      %812 = vrot.lane.b32.xlu0 %v803, 127
      %v813 = vpop.permute.xlu0 %812
      %814 = vrot.lane.b32.xlu0 %v804, 127
      %v815 = vpop.permute.xlu0 %814
      %816 = vrot.lane.b32.xlu0 %v805, 127
      %v817 = vpop.permute.xlu0 %816
      %818 = vrot.lane.b32.xlu0 %v806, 127
      %v819 = vpop.permute.xlu0 %818
      %820 = vrot.lane.b32.xlu0 %v807, 127
      %v821 = vpop.permute.xlu0 %820
      %822 = vrot.lane.b32.xlu0 %v808, 127
      %v823 = vpop.permute.xlu0 %822
      %824 = vrot.lane.b32.xlu0 %v809, 127
      %v825 = vpop.permute.xlu0 %824
      %826 = vrot.lane.b32.xlu0 %v810, 127
      %v827 = vpop.permute.xlu0 %826
      %828 = vrot.lane.b32.xlu0 %v811, 127
      %v829 = vpop.permute.xlu0 %828
      %vm830 = vcmask 1039360
      %v831 = vsel %vm830, %v813, %v815
      %v832 = vsel %vm830, %v815, %v817
      %v833 = vsel %vm830, %v817, %v819
      %v834 = vsel %vm830, %v819, %v821
      %v835 = vsel %vm830, %v821, %v823
      %v836 = vsel %vm830, %v823, %v825
      %v837 = vsel %vm830, %v825, %v827
      %v838 = vsel %vm830, %v827, %v829
      %839 = vrot.lane.b32.xlu0 %v766, 126
      %v840 = vpop.permute.xlu0 %839
      %841 = vrot.lane.b32.xlu0 %v769, 126
      %v842 = vpop.permute.xlu0 %841
      %843 = vrot.lane.b32.xlu0 %v772, 126
      %v844 = vpop.permute.xlu0 %843
      %845 = vrot.lane.b32.xlu0 %v775, 126
      %v846 = vpop.permute.xlu0 %845
      %847 = vrot.lane.b32.xlu0 %v778, 126
      %v848 = vpop.permute.xlu0 %847
      %849 = vrot.lane.b32.xlu0 %v781, 126
      %v850 = vpop.permute.xlu0 %849
      %851 = vrot.lane.b32.xlu0 %v784, 126
      %v852 = vpop.permute.xlu0 %851
      %853 = vrot.lane.b32.xlu0 %v787, 126
      %v854 = vpop.permute.xlu0 %853
      %855 = vrot.lane.b32.xlu0 %v790, 126
      %v856 = vpop.permute.xlu0 %855
      %vm857 = vcmask 1031168
      %v858 = vsel %vm857, %v840, %v842
      %v859 = vsel %vm857, %v842, %v844
      %v860 = vsel %vm857, %v844, %v846
      %v861 = vsel %vm857, %v846, %v848
      %v862 = vsel %vm857, %v848, %v850
      %v863 = vsel %vm857, %v850, %v852
      %v864 = vsel %vm857, %v852, %v854
      %v865 = vsel %vm857, %v854, %v856
      %866 = vrot.lane.b32.xlu0 %v803, 94
      %v867 = vpop.permute.xlu0 %866
      %868 = vrot.lane.b32.xlu0 %v804, 94
      %v869 = vpop.permute.xlu0 %868
      %870 = vrot.lane.b32.xlu0 %v805, 94
      %v871 = vpop.permute.xlu0 %870
      %872 = vrot.lane.b32.xlu0 %v806, 94
      %v873 = vpop.permute.xlu0 %872
      %874 = vrot.lane.b32.xlu0 %v807, 94
      %v875 = vpop.permute.xlu0 %874
      %876 = vrot.lane.b32.xlu0 %v808, 94
      %v877 = vpop.permute.xlu0 %876
      %878 = vrot.lane.b32.xlu0 %v809, 94
      %v879 = vpop.permute.xlu0 %878
      %880 = vrot.lane.b32.xlu0 %v810, 94
      %v881 = vpop.permute.xlu0 %880
      %882 = vrot.lane.b32.xlu0 %v811, 94
      %v883 = vpop.permute.xlu0 %882
      %vm884 = vcmask 769024
      %v885 = vsel %vm884, %v867, %v869
      %v886 = vsel %vm884, %v869, %v871
      %v887 = vsel %vm884, %v871, %v873
      %v888 = vsel %vm884, %v873, %v875
      %v889 = vsel %vm884, %v875, %v877
      %v890 = vsel %vm884, %v877, %v879
      %v891 = vsel %vm884, %v879, %v881
      %v892 = vsel %vm884, %v881, %v883
      %893 = vrot.lane.b32.xlu0 %v766, 93
      %v894 = vpop.permute.xlu0 %893
      %895 = vrot.lane.b32.xlu0 %v769, 93
      %v896 = vpop.permute.xlu0 %895
      %897 = vrot.lane.b32.xlu0 %v772, 93
      %v898 = vpop.permute.xlu0 %897
      %899 = vrot.lane.b32.xlu0 %v775, 93
      %v900 = vpop.permute.xlu0 %899
      %901 = vrot.lane.b32.xlu0 %v778, 93
      %v902 = vpop.permute.xlu0 %901
      %903 = vrot.lane.b32.xlu0 %v781, 93
      %v904 = vpop.permute.xlu0 %903
      %905 = vrot.lane.b32.xlu0 %v784, 93
      %v906 = vpop.permute.xlu0 %905
      %907 = vrot.lane.b32.xlu0 %v787, 93
      %v908 = vpop.permute.xlu0 %907
      %909 = vrot.lane.b32.xlu0 %v790, 93
      %v910 = vpop.permute.xlu0 %909
      %vm911 = vcmask 760832
      %v912 = vsel %vm911, %v894, %v896
      %v913 = vsel %vm911, %v896, %v898
      %v914 = vsel %vm911, %v898, %v900
      %v915 = vsel %vm911, %v900, %v902
      %v916 = vsel %vm911, %v902, %v904
      %v917 = vsel %vm911, %v904, %v906
      %v918 = vsel %vm911, %v906, %v908
      %v919 = vsel %vm911, %v908, %v910
      %920 = vrot.lane.b32.xlu0 %v803, 92
      %v921 = vpop.permute.xlu0 %920
      %922 = vrot.lane.b32.xlu0 %v804, 92
      %v923 = vpop.permute.xlu0 %922
      %924 = vrot.lane.b32.xlu0 %v805, 92
      %v925 = vpop.permute.xlu0 %924
      %926 = vrot.lane.b32.xlu0 %v806, 92
      %v927 = vpop.permute.xlu0 %926
      %928 = vrot.lane.b32.xlu0 %v807, 92
      %v929 = vpop.permute.xlu0 %928
      %930 = vrot.lane.b32.xlu0 %v808, 92
      %v931 = vpop.permute.xlu0 %930
      %932 = vrot.lane.b32.xlu0 %v809, 92
      %v933 = vpop.permute.xlu0 %932
      %934 = vrot.lane.b32.xlu0 %v810, 92
      %v935 = vpop.permute.xlu0 %934
      %936 = vrot.lane.b32.xlu0 %v811, 92
      %v937 = vpop.permute.xlu0 %936
      %vm938 = vcmask 752640
      %v939 = vsel %vm938, %v921, %v923
      %v940 = vsel %vm938, %v923, %v925
      %v941 = vsel %vm938, %v925, %v927
      %v942 = vsel %vm938, %v927, %v929
      %v943 = vsel %vm938, %v929, %v931
      %v944 = vsel %vm938, %v931, %v933
      %v945 = vsel %vm938, %v933, %v935
      %v946 = vsel %vm938, %v935, %v937
      %948 = vrot.lane.b32.xlu0 %v766, 60
      %v949 = vpop.permute.xlu0 %948
      %950 = vrot.lane.b32.xlu0 %v769, 60
      %v951 = vpop.permute.xlu0 %950
      %952 = vrot.lane.b32.xlu0 %v772, 60
      %v953 = vpop.permute.xlu0 %952
      %954 = vrot.lane.b32.xlu0 %v775, 60
      %v955 = vpop.permute.xlu0 %954
      %956 = vrot.lane.b32.xlu0 %v778, 60
      %v957 = vpop.permute.xlu0 %956
      %958 = vrot.lane.b32.xlu0 %v781, 60
      %v959 = vpop.permute.xlu0 %958
      %960 = vrot.lane.b32.xlu0 %v784, 60
      %v961 = vpop.permute.xlu0 %960
      %962 = vrot.lane.b32.xlu0 %v787, 60
      %v963 = vpop.permute.xlu0 %962
      %964 = vrot.lane.b32.xlu0 %v790, 60
      %v965 = vpop.permute.xlu0 %964
      %966 = vrot.lane.b32.xlu0 %v793, 60
      %v967 = vpop.permute.xlu0 %966
      %vm968 = vcmask 490496
      %v969 = vsel %vm968, %v949, %v951
      %v970 = vsel %vm968, %v951, %v953
      %v971 = vsel %vm968, %v953, %v955
      %v972 = vsel %vm968, %v955, %v957
      %v973 = vsel %vm968, %v957, %v959
      %v974 = vsel %vm968, %v959, %v961
      %v975 = vsel %vm968, %v961, %v963
      %v976 = vsel %vm968, %v963, %v965
      %v977 = vsel %vm968, %v965, %v967
      %v978 = vrot.slane %v793, 4
      %979 = vrot.lane.b32.xlu0 %v803, 59
      %v980 = vpop.permute.xlu0 %979
      %981 = vrot.lane.b32.xlu0 %v804, 59
      %v982 = vpop.permute.xlu0 %981
      %983 = vrot.lane.b32.xlu0 %v805, 59
      %v984 = vpop.permute.xlu0 %983
      %985 = vrot.lane.b32.xlu0 %v806, 59
      %v986 = vpop.permute.xlu0 %985
      %987 = vrot.lane.b32.xlu0 %v807, 59
      %v988 = vpop.permute.xlu0 %987
      %989 = vrot.lane.b32.xlu0 %v808, 59
      %v990 = vpop.permute.xlu0 %989
      %991 = vrot.lane.b32.xlu0 %v809, 59
      %v992 = vpop.permute.xlu0 %991
      %993 = vrot.lane.b32.xlu0 %v810, 59
      %v994 = vpop.permute.xlu0 %993
      %995 = vrot.lane.b32.xlu0 %v811, 59
      %v996 = vpop.permute.xlu0 %995
      %997 = vrot.lane.b32.xlu0 %v978, 59
      %v998 = vpop.permute.xlu0 %997
      %vm999 = vcmask 482304
      %v1000 = vsel %vm999, %v980, %v982
      %v1001 = vsel %vm999, %v982, %v984
      %v1002 = vsel %vm999, %v984, %v986
      %v1003 = vsel %vm999, %v986, %v988
      %v1004 = vsel %vm999, %v988, %v990
      %v1005 = vsel %vm999, %v990, %v992
      %v1006 = vsel %vm999, %v992, %v994
      %v1007 = vsel %vm999, %v994, %v996
      %v1008 = vsel %vm999, %v996, %v998
      %1009 = vrot.lane.b32.xlu0 %v766, 58
      %v1010 = vpop.permute.xlu0 %1009
      %1011 = vrot.lane.b32.xlu0 %v769, 58
      %v1012 = vpop.permute.xlu0 %1011
      %1013 = vrot.lane.b32.xlu0 %v772, 58
      %v1014 = vpop.permute.xlu0 %1013
      %1015 = vrot.lane.b32.xlu0 %v775, 58
      %v1016 = vpop.permute.xlu0 %1015
      %1017 = vrot.lane.b32.xlu0 %v778, 58
      %v1018 = vpop.permute.xlu0 %1017
      %1019 = vrot.lane.b32.xlu0 %v781, 58
      %v1020 = vpop.permute.xlu0 %1019
      %1021 = vrot.lane.b32.xlu0 %v784, 58
      %v1022 = vpop.permute.xlu0 %1021
      %1023 = vrot.lane.b32.xlu0 %v787, 58
      %v1024 = vpop.permute.xlu0 %1023
      %1025 = vrot.lane.b32.xlu0 %v790, 58
      %v1026 = vpop.permute.xlu0 %1025
      %1027 = vrot.lane.b32.xlu0 %v793, 58
      %v1028 = vpop.permute.xlu0 %1027
      %vm1029 = vcmask 474112
      %v1030 = vsel %vm1029, %v1010, %v1012
      %v1031 = vsel %vm1029, %v1012, %v1014
      %v1032 = vsel %vm1029, %v1014, %v1016
      %v1033 = vsel %vm1029, %v1016, %v1018
      %v1034 = vsel %vm1029, %v1018, %v1020
      %v1035 = vsel %vm1029, %v1020, %v1022
      %v1036 = vsel %vm1029, %v1022, %v1024
      %v1037 = vsel %vm1029, %v1024, %v1026
      %v1038 = vsel %vm1029, %v1026, %v1028
      %vm1039 = vcmask 1043456
      %v1041 = vsel %vm1039, %v766, %v831
      %v1044 = vsel %vm1039, %v769, %v832
      %v1047 = vsel %vm1039, %v772, %v833
      %v1050 = vsel %vm1039, %v775, %v834
      %v1053 = vsel %vm1039, %v778, %v835
      %v1056 = vsel %vm1039, %v781, %v836
      %v1059 = vsel %vm1039, %v784, %v837
      %v1062 = vsel %vm1039, %v787, %v838
      %v1065 = vsel %vm1039, %v790, %v829
      %v1069 = vsel %vm1039, %v858, %v885
      %v1073 = vsel %vm1039, %v859, %v886
      %v1077 = vsel %vm1039, %v860, %v887
      %v1081 = vsel %vm1039, %v861, %v888
      %v1085 = vsel %vm1039, %v862, %v889
      %v1089 = vsel %vm1039, %v863, %v890
      %v1093 = vsel %vm1039, %v864, %v891
      %v1097 = vsel %vm1039, %v865, %v892
      %v1101 = vsel %vm1039, %v856, %v883
      %v1105 = vsel %vm1039, %v912, %v939
      %v1109 = vsel %vm1039, %v913, %v940
      %v1113 = vsel %vm1039, %v914, %v941
      %v1117 = vsel %vm1039, %v915, %v942
      %v1121 = vsel %vm1039, %v916, %v943
      %v1125 = vsel %vm1039, %v917, %v944
      %v1129 = vsel %vm1039, %v918, %v945
      %v1133 = vsel %vm1039, %v919, %v946
      %v1137 = vsel %vm1039, %v910, %v937
      %v1141 = vsel %vm1039, %v969, %v1000
      %v1145 = vsel %vm1039, %v970, %v1001
      %v1149 = vsel %vm1039, %v971, %v1002
      %v1153 = vsel %vm1039, %v972, %v1003
      %v1157 = vsel %vm1039, %v973, %v1004
      %v1161 = vsel %vm1039, %v974, %v1005
      %v1165 = vsel %vm1039, %v975, %v1006
      %v1169 = vsel %vm1039, %v976, %v1007
      %v1173 = vsel %vm1039, %v977, %v1008
      %v1175 = vld [vmem:[%s4] sm:$0x3]
      %v1176 = vld [vmem:[%s5] sm:$0xf]
      %1178 = vset.pattern.permute.xlu0 0
      %1179 = vperm.xlu0 %1178, %v1176
      %v1180 = vpop.permute.xlu0 %1179
      %vm1182 = vcmask 588800
      %v1184 = vsel %vm1182, %v1175, 0
      %v1187 = vsel %vm1039, %v1030, 0
      %v1190 = vsel %vm1039, %v1031, 0
      %v1193 = vsel %vm1039, %v1032, 0
      %v1196 = vsel %vm1039, %v1033, 0
      %v1199 = vsel %vm1039, %v1034, 0
      %v1202 = vsel %vm1039, %v1035, 0
      %v1205 = vsel %vm1039, %v1036, 0
      %v1208 = vsel %vm1039, %v1037, 0
      %v1211 = vsel %vm1039, %v1038, 0
      %1213 = vmatprep.subr.bf16.mxu0 %v1044
      %1214 = vmatpush1.bf16.msra.mxu0 %v1041
      %1215 = vmatprep.subr.bf16.mxu0 %v1073
      %1216 = vmatpush1.bf16.msra.mxu0 %v1069
      %1217 = vmatprep.subr.bf16.mxu0 %v1109
      %1218 = vmatpush1.bf16.msra.mxu0 %v1105
      %1219 = vmatprep.subr.bf16.mxu0 %v1145
      %1220 = vmatpush1.bf16.msra.mxu0 %v1141
      %1221 = vmatprep.subr.bf16.mxu0 %v1190
      %1222 = vmatpush1.bf16.msra.mxu0 %v1187
      %1223 = vmatprep.subr.bf16.mxu0 0
      %1224 = vmatpush1.bf16.msra.mxu0 0
      %1225 = vmatprep.subr.bf16.mxu0 0
      %1226 = vmatpush1.bf16.msra.mxu0 0
      %1227 = vmatprep.subr.bf16.mxu0 0
      %1228 = vmatpush1.bf16.msra.mxu0 0
      %1229 = vmatprep.subr.bf16.mxu0 0
      %1230 = vmatpush1.bf16.msra.mxu0 0
      %1231 = vmatprep.subr.bf16.mxu0 0
      %1232 = vmatpush1.bf16.msra.mxu0 0
      %1233 = vmatprep.subr.bf16.mxu0 0
      %1234 = vmatpush1.bf16.msra.mxu0 0
      %1235 = vmatprep.subr.bf16.mxu0 0
      %1236 = vmatpush1.bf16.msra.mxu0 0
      %1237 = vmatprep.subr.bf16.mxu0 0
      %1238 = vmatpush1.bf16.msra.mxu0 0
      %1239 = vmatprep.subr.bf16.mxu0 0
      %1240 = vmatpush1.bf16.msra.mxu0 0
      %1241 = vmatprep.subr.bf16.mxu0 0
      %1242 = vmatpush1.bf16.msra.mxu0 0
      %1243 = vmatprep.subr.bf16.mxu0 0
      %1244 = vmatpush1.bf16.msra.mxu0 0
      %1245 = vmatprep.mubr.bf16.mxu0 0
      %1246 = vmatmul.mubr.bf16.gmra.mrb[0].mxu0 %v1184
      %v1247 = vpop.f32.mrb[0].mxu0
      %v1248 = vadd.f32 %v1180, %v1247
      %v1249 = vpop.f32.mrb[0].mxu0
      %v1250 = vadd.f32 %v1180, %v1249
      %v1251 = vpop.f32.mrb[0].mxu0
      %v1252 = vpop.f32.mrb[0].mxu0
      %1253 = vdwg.mxu0
      %1254 = vmatprep.subr.bf16.mxu0 %v1050
      %1255 = vmatpush1.bf16.msra.mxu0 %v1047
      %1256 = vmatprep.subr.bf16.mxu0 %v1081
      %1257 = vmatpush1.bf16.msra.mxu0 %v1077
      %1258 = vmatprep.subr.bf16.mxu0 %v1117
      %1259 = vmatpush1.bf16.msra.mxu0 %v1113
      %1260 = vmatprep.subr.bf16.mxu0 %v1153
      %1261 = vmatpush1.bf16.msra.mxu0 %v1149
      %1262 = vmatprep.subr.bf16.mxu0 %v1196
      %1263 = vmatpush1.bf16.msra.mxu0 %v1193
      %1264 = vmatprep.subr.bf16.mxu0 0
      %1265 = vmatpush1.bf16.msra.mxu0 0
      %1266 = vmatprep.subr.bf16.mxu0 0
      %1267 = vmatpush1.bf16.msra.mxu0 0
      %1268 = vmatprep.subr.bf16.mxu0 0
      %1269 = vmatpush1.bf16.msra.mxu0 0
      %1270 = vmatprep.subr.bf16.mxu0 0
      %1271 = vmatpush1.bf16.msra.mxu0 0
      %1272 = vmatprep.subr.bf16.mxu0 0
      %1273 = vmatpush1.bf16.msra.mxu0 0
      %1274 = vmatprep.subr.bf16.mxu0 0
      %1275 = vmatpush1.bf16.msra.mxu0 0
      %1276 = vmatprep.subr.bf16.mxu0 0
      %1277 = vmatpush1.bf16.msra.mxu0 0
      %1278 = vmatprep.subr.bf16.mxu0 0
      %1279 = vmatpush1.bf16.msra.mxu0 0
      %1280 = vmatprep.subr.bf16.mxu0 0
      %1281 = vmatpush1.bf16.msra.mxu0 0
      %1282 = vmatprep.subr.bf16.mxu0 0
      %1283 = vmatpush1.bf16.msra.mxu0 0
      %1284 = vmatprep.subr.bf16.mxu0 0
      %1285 = vmatpush1.bf16.msra.mxu0 0
      %1286 = vmatprep.mubr.bf16.mxu0 0
      %1287 = vmatmul.mubr.bf16.gmra.mrb[0].mxu0 %v1184
      %v1288 = vpop.f32.mrb[0].mxu0
      %v1289 = vadd.f32 %v1180, %v1288
      %v1290 = vpop.f32.mrb[0].mxu0
      %v1291 = vadd.f32 %v1180, %v1290
      %v1292 = vpop.f32.mrb[0].mxu0
      %v1293 = vpop.f32.mrb[0].mxu0
      %1294 = vdwg.mxu0
      %1295 = vmatprep.subr.bf16.mxu0 %v1056
      %1296 = vmatpush1.bf16.msra.mxu0 %v1053
      %1297 = vmatprep.subr.bf16.mxu0 %v1089
      %1298 = vmatpush1.bf16.msra.mxu0 %v1085
      %1299 = vmatprep.subr.bf16.mxu0 %v1125
      %1300 = vmatpush1.bf16.msra.mxu0 %v1121
      %1301 = vmatprep.subr.bf16.mxu0 %v1161
      %1302 = vmatpush1.bf16.msra.mxu0 %v1157
      %1303 = vmatprep.subr.bf16.mxu0 %v1202
      %1304 = vmatpush1.bf16.msra.mxu0 %v1199
      %1305 = vmatprep.subr.bf16.mxu0 0
      %1306 = vmatpush1.bf16.msra.mxu0 0
      %1307 = vmatprep.subr.bf16.mxu0 0
      %1308 = vmatpush1.bf16.msra.mxu0 0
      %1309 = vmatprep.subr.bf16.mxu0 0
      %1310 = vmatpush1.bf16.msra.mxu0 0
      %1311 = vmatprep.subr.bf16.mxu0 0
      %1312 = vmatpush1.bf16.msra.mxu0 0
      %1313 = vmatprep.subr.bf16.mxu0 0
      %1314 = vmatpush1.bf16.msra.mxu0 0
      %1315 = vmatprep.subr.bf16.mxu0 0
      %1316 = vmatpush1.bf16.msra.mxu0 0
      %1317 = vmatprep.subr.bf16.mxu0 0
      %1318 = vmatpush1.bf16.msra.mxu0 0
      %1319 = vmatprep.subr.bf16.mxu0 0
      %1320 = vmatpush1.bf16.msra.mxu0 0
      %1321 = vmatprep.subr.bf16.mxu0 0
      %1322 = vmatpush1.bf16.msra.mxu0 0
      %1323 = vmatprep.subr.bf16.mxu0 0
      %1324 = vmatpush1.bf16.msra.mxu0 0
      %1325 = vmatprep.subr.bf16.mxu0 0
      %1326 = vmatpush1.bf16.msra.mxu0 0
      %1327 = vmatprep.mubr.bf16.mxu0 0
      %1328 = vmatmul.mubr.bf16.gmra.mrb[0].mxu0 %v1184
      %v1329 = vpop.f32.mrb[0].mxu0
      %v1330 = vadd.f32 %v1180, %v1329
      %v1331 = vpop.f32.mrb[0].mxu0
      %v1332 = vadd.f32 %v1180, %v1331
      %v1333 = vpop.f32.mrb[0].mxu0
      %v1334 = vpop.f32.mrb[0].mxu0
      %1335 = vdwg.mxu0
      %1336 = vmatprep.subr.bf16.mxu0 %v1062
      %1337 = vmatpush1.bf16.msra.mxu0 %v1059
      %1338 = vmatprep.subr.bf16.mxu0 %v1097
      %1339 = vmatpush1.bf16.msra.mxu0 %v1093
      %1340 = vmatprep.subr.bf16.mxu0 %v1133
      %1341 = vmatpush1.bf16.msra.mxu0 %v1129
      %1342 = vmatprep.subr.bf16.mxu0 %v1169
      %1343 = vmatpush1.bf16.msra.mxu0 %v1165
      %1344 = vmatprep.subr.bf16.mxu0 %v1208
      %1345 = vmatpush1.bf16.msra.mxu0 %v1205
      %1346 = vmatprep.subr.bf16.mxu0 0
      %1347 = vmatpush1.bf16.msra.mxu0 0
      %1348 = vmatprep.subr.bf16.mxu0 0
      %1349 = vmatpush1.bf16.msra.mxu0 0
      %1350 = vmatprep.subr.bf16.mxu0 0
      %1351 = vmatpush1.bf16.msra.mxu0 0
      %1352 = vmatprep.subr.bf16.mxu0 0
      %1353 = vmatpush1.bf16.msra.mxu0 0
      %1354 = vmatprep.subr.bf16.mxu0 0
      %1355 = vmatpush1.bf16.msra.mxu0 0
      %1356 = vmatprep.subr.bf16.mxu0 0
      %1357 = vmatpush1.bf16.msra.mxu0 0
      %1358 = vmatprep.subr.bf16.mxu0 0
      %1359 = vmatpush1.bf16.msra.mxu0 0
      %1360 = vmatprep.subr.bf16.mxu0 0
      %1361 = vmatpush1.bf16.msra.mxu0 0
      %1362 = vmatprep.subr.bf16.mxu0 0
      %1363 = vmatpush1.bf16.msra.mxu0 0
      %1364 = vmatprep.subr.bf16.mxu0 0
      %1365 = vmatpush1.bf16.msra.mxu0 0
      %1366 = vmatprep.subr.bf16.mxu0 0
      %1367 = vmatpush1.bf16.msra.mxu0 0
      %1368 = vmatprep.mubr.bf16.mxu0 0
      %1369 = vmatmul.mubr.bf16.gmra.mrb[0].mxu0 %v1184
      %v1370 = vpop.f32.mrb[0].mxu0
      %v1371 = vadd.f32 %v1180, %v1370
      %v1372 = vpop.f32.mrb[0].mxu0
      %v1373 = vadd.f32 %v1180, %v1372
      %v1374 = vpop.f32.mrb[0].mxu0
      %v1375 = vpop.f32.mrb[0].mxu0
      %1376 = vdwg.mxu0
      %1377 = vmatprep.subr.bf16.mxu0 0
      %1378 = vmatpush1.bf16.msra.mxu0 %v1065
      %1379 = vmatprep.subr.bf16.mxu0 0
      %1380 = vmatpush1.bf16.msra.mxu0 %v1101
      %1381 = vmatprep.subr.bf16.mxu0 0
      %1382 = vmatpush1.bf16.msra.mxu0 %v1137
      %1383 = vmatprep.subr.bf16.mxu0 0
      %1384 = vmatpush1.bf16.msra.mxu0 %v1173
      %1385 = vmatprep.subr.bf16.mxu0 0
      %1386 = vmatpush1.bf16.msra.mxu0 %v1211
      %1387 = vmatprep.subr.bf16.mxu0 0
      %1388 = vmatpush1.bf16.msra.mxu0 0
      %1389 = vmatprep.subr.bf16.mxu0 0
      %1390 = vmatpush1.bf16.msra.mxu0 0
      %1391 = vmatprep.subr.bf16.mxu0 0
      %1392 = vmatpush1.bf16.msra.mxu0 0
      %1393 = vmatprep.subr.bf16.mxu0 0
      %1394 = vmatpush1.bf16.msra.mxu0 0
      %1395 = vmatprep.subr.bf16.mxu0 0
      %1396 = vmatpush1.bf16.msra.mxu0 0
      %1397 = vmatprep.subr.bf16.mxu0 0
      %1398 = vmatpush1.bf16.msra.mxu0 0
      %1399 = vmatprep.subr.bf16.mxu0 0
      %1400 = vmatpush1.bf16.msra.mxu0 0
      %1401 = vmatprep.subr.bf16.mxu0 0
      %1402 = vmatpush1.bf16.msra.mxu0 0
      %1403 = vmatprep.subr.bf16.mxu0 0
      %1404 = vmatpush1.bf16.msra.mxu0 0
      %1405 = vmatprep.subr.bf16.mxu0 0
      %1406 = vmatpush1.bf16.msra.mxu0 0
      %1407 = vmatprep.subr.bf16.mxu0 0
      %1408 = vmatpush1.bf16.msra.mxu0 0
      %1409 = vmatprep.mubr.bf16.mxu0 0
      %1410 = vmatmul.mubr.bf16.gmra.mrb[0].mxu0 %v1184
      %v1411 = vpop.f32.mrb[0].mxu0
      %v1412 = vadd.f32 %v1180, %v1411
      %v1413 = vpop.f32.mrb[0].mxu0
      %v1414 = vpop.f32.mrb[0].mxu0
      %v1415 = vpop.f32.mrb[0].mxu0
      %1416 = vdwg.mxu0
      %v1417 = vmax.f32 %v1248, 0.0
      %v1418 = vmax.f32 %v1250, 0.0
      %v1419 = vmax.f32 %v1289, 0.0
      %v1420 = vmax.f32 %v1291, 0.0
      %v1421 = vmax.f32 %v1330, 0.0
      %v1422 = vmax.f32 %v1332, 0.0
      %v1423 = vmax.f32 %v1371, 0.0
      %v1424 = vmax.f32 %v1373, 0.0
      %v1425 = vmax.f32 %v1412, 0.0
      %v1426 = vld [vmem:[%s8] sm:$0xff]
      %v1427 = vld [vmem:[%s8 + $0x8] sm:$0x1]
      %v1430 = vlaneseq
      %v1431 = vshrl.u32 %v1430, 7
      %v1432 = vsub.s32 0, %v1431
      %v1433 = vrot.slane %v1426, %v1432
      %v1434 = vlaneseq
      %v1435 = vshrl.u32 %v1434, 7
      %v1436 = vsub.s32 1, %v1435
      %v1437 = vrot.slane %v1426, %v1436
      %v1438 = vlaneseq
      %v1439 = vshrl.u32 %v1438, 7
      %v1440 = vsub.s32 2, %v1439
      %v1441 = vrot.slane %v1426, %v1440
      %v1442 = vlaneseq
      %v1443 = vshrl.u32 %v1442, 7
      %v1444 = vsub.s32 3, %v1443
      %v1445 = vrot.slane %v1426, %v1444
      %v1446 = vlaneseq
      %v1447 = vshrl.u32 %v1446, 7
      %v1448 = vsub.s32 4, %v1447
      %v1449 = vrot.slane %v1426, %v1448
      %v1450 = vlaneseq
      %v1451 = vshrl.u32 %v1450, 7
      %v1452 = vsub.s32 5, %v1451
      %v1453 = vrot.slane %v1426, %v1452
      %v1454 = vlaneseq
      %v1455 = vshrl.u32 %v1454, 7
      %v1456 = vsub.s32 6, %v1455
      %v1457 = vrot.slane %v1426, %v1456
      %v1458 = vlaneseq
      %v1459 = vshrl.u32 %v1458, 7
      %v1460 = vsub.s32 7, %v1459
      %v1461 = vrot.slane %v1426, %v1460
      %v1462 = vlaneseq
      %v1463 = vshrl.u32 %v1462, 7
      %v1464 = vsub.s32 0, %v1463
      %v1465 = vrot.slane %v1427, %v1464
      %v1475 = vmul.f32 %v1417, %v1433
      %v1476 = vmul.f32 %v1418, %v1437
      %v1477 = vmul.f32 %v1419, %v1441
      %v1478 = vmul.f32 %v1420, %v1445
      %v1479 = vmul.f32 %v1421, %v1449
      %v1480 = vmul.f32 %v1422, %v1453
      %v1481 = vmul.f32 %v1423, %v1457
      %v1482 = vmul.f32 %v1424, %v1461
      %v1483 = vmul.f32 %v1425, %v1465
      %v1484 = vpack.c.bf16 %v1475, %v1475
      %v1485 = vpack.c.bf16 %v1476, %v1476
      %v1486 = vpack.c.bf16 %v1477, %v1477
      %v1487 = vpack.c.bf16 %v1478, %v1478
      %v1488 = vpack.c.bf16 %v1479, %v1479
      %v1489 = vpack.c.bf16 %v1480, %v1480
      %v1490 = vpack.c.bf16 %v1481, %v1481
      %v1491 = vpack.c.bf16 %v1482, %v1482
      %v1492 = vpack.c.bf16 %v1483, %v1483
      %1502 = vrot.lane.b32.xlu0 %v1484, 35
      %v1503 = vpop.permute.xlu0 %1502
      %1504 = vrot.lane.b32.xlu0 %v1485, 35
      %v1505 = vpop.permute.xlu0 %1504
      %1506 = vrot.lane.b32.xlu0 %v1486, 35
      %v1507 = vpop.permute.xlu0 %1506
      %1508 = vrot.lane.b32.xlu0 %v1487, 35
      %v1509 = vpop.permute.xlu0 %1508
      %1510 = vrot.lane.b32.xlu0 %v1488, 35
      %v1511 = vpop.permute.xlu0 %1510
      %1512 = vrot.lane.b32.xlu0 %v1489, 35
      %v1513 = vpop.permute.xlu0 %1512
      %1514 = vrot.lane.b32.xlu0 %v1490, 35
      %v1515 = vpop.permute.xlu0 %1514
      %1516 = vrot.lane.b32.xlu0 %v1491, 35
      %v1517 = vpop.permute.xlu0 %1516
      %1518 = vrot.lane.b32.xlu0 %v1492, 35
      %v1519 = vpop.permute.xlu0 %1518
      %vm1520 = vcmask 285696
      %v1521 = vsel %vm1520, %v1503, %v1505
      %v1522 = vsel %vm1520, %v1505, %v1507
      %v1523 = vsel %vm1520, %v1507, %v1509
      %v1524 = vsel %vm1520, %v1509, %v1511
      %v1525 = vsel %vm1520, %v1511, %v1513
      %v1526 = vsel %vm1520, %v1513, %v1515
      %v1527 = vsel %vm1520, %v1515, %v1517
      %v1528 = vsel %vm1520, %v1517, %v1519
      %vm1529 = vcmask 285696
      %v1532 = vsel %vm1529, 0, %v1503
      %vm1533 = vcmask 809984
      %v1535 = vsel %vm1533, %v1528, 0
      %v1538 = vrot.slane %v1532, 6
      %v1539 = vrot.slane %v1521, 6
      %v1540 = vrot.slane %v1522, 6
      %v1541 = vrot.slane %v1523, 6
      %v1542 = vrot.slane %v1524, 6
      %v1543 = vrot.slane %v1525, 6
      %v1544 = vrot.slane %v1526, 6
      %v1545 = vrot.slane %v1527, 6
      %v1546 = vrot.slane %v1535, 6
      %1547 = vrot.lane.b32.xlu0 %v1538, 127
      %v1548 = vpop.permute.xlu0 %1547
      %1549 = vrot.lane.b32.xlu0 %v1539, 127
      %v1550 = vpop.permute.xlu0 %1549
      %1551 = vrot.lane.b32.xlu0 %v1540, 127
      %v1552 = vpop.permute.xlu0 %1551
      %1553 = vrot.lane.b32.xlu0 %v1541, 127
      %v1554 = vpop.permute.xlu0 %1553
      %1555 = vrot.lane.b32.xlu0 %v1542, 127
      %v1556 = vpop.permute.xlu0 %1555
      %1557 = vrot.lane.b32.xlu0 %v1543, 127
      %v1558 = vpop.permute.xlu0 %1557
      %1559 = vrot.lane.b32.xlu0 %v1544, 127
      %v1560 = vpop.permute.xlu0 %1559
      %1561 = vrot.lane.b32.xlu0 %v1545, 127
      %v1562 = vpop.permute.xlu0 %1561
      %1563 = vrot.lane.b32.xlu0 %v1546, 127
      %v1564 = vpop.permute.xlu0 %1563
      %v1565 = vsel %vm830, %v1548, %v1550
      %v1566 = vsel %vm830, %v1550, %v1552
      %v1567 = vsel %vm830, %v1552, %v1554
      %v1568 = vsel %vm830, %v1554, %v1556
      %v1569 = vsel %vm830, %v1556, %v1558
      %v1570 = vsel %vm830, %v1558, %v1560
      %v1571 = vsel %vm830, %v1560, %v1562
      %v1572 = vsel %vm830, %v1562, %v1564
      %v1573 = vrot.slane %v1532, 4
      %v1574 = vrot.slane %v1521, 4
      %v1575 = vrot.slane %v1522, 4
      %v1576 = vrot.slane %v1523, 4
      %v1577 = vrot.slane %v1524, 4
      %v1578 = vrot.slane %v1525, 4
      %v1579 = vrot.slane %v1526, 4
      %v1580 = vrot.slane %v1527, 4
      %v1581 = vrot.slane %v1535, 4
      %1582 = vrot.lane.b32.xlu0 %v1573, 126
      %v1583 = vpop.permute.xlu0 %1582
      %1584 = vrot.lane.b32.xlu0 %v1574, 126
      %v1585 = vpop.permute.xlu0 %1584
      %1586 = vrot.lane.b32.xlu0 %v1575, 126
      %v1587 = vpop.permute.xlu0 %1586
      %1588 = vrot.lane.b32.xlu0 %v1576, 126
      %v1589 = vpop.permute.xlu0 %1588
      %1590 = vrot.lane.b32.xlu0 %v1577, 126
      %v1591 = vpop.permute.xlu0 %1590
      %1592 = vrot.lane.b32.xlu0 %v1578, 126
      %v1593 = vpop.permute.xlu0 %1592
      %1594 = vrot.lane.b32.xlu0 %v1579, 126
      %v1595 = vpop.permute.xlu0 %1594
      %1596 = vrot.lane.b32.xlu0 %v1580, 126
      %v1597 = vpop.permute.xlu0 %1596
      %1598 = vrot.lane.b32.xlu0 %v1581, 126
      %v1599 = vpop.permute.xlu0 %1598
      %v1600 = vsel %vm857, %v1583, %v1585
      %v1601 = vsel %vm857, %v1585, %v1587
      %v1602 = vsel %vm857, %v1587, %v1589
      %v1603 = vsel %vm857, %v1589, %v1591
      %v1604 = vsel %vm857, %v1591, %v1593
      %v1605 = vsel %vm857, %v1593, %v1595
      %v1606 = vsel %vm857, %v1595, %v1597
      %v1607 = vsel %vm857, %v1597, %v1599
      %v1608 = vrot.slane %v1532, 2
      %v1609 = vrot.slane %v1521, 2
      %v1610 = vrot.slane %v1522, 2
      %v1611 = vrot.slane %v1523, 2
      %v1612 = vrot.slane %v1524, 2
      %v1613 = vrot.slane %v1525, 2
      %v1614 = vrot.slane %v1526, 2
      %v1615 = vrot.slane %v1527, 2
      %v1616 = vrot.slane %v1535, 2
      %1617 = vrot.lane.b32.xlu0 %v1608, 94
      %v1618 = vpop.permute.xlu0 %1617
      %1619 = vrot.lane.b32.xlu0 %v1609, 94
      %v1620 = vpop.permute.xlu0 %1619
      %1621 = vrot.lane.b32.xlu0 %v1610, 94
      %v1622 = vpop.permute.xlu0 %1621
      %1623 = vrot.lane.b32.xlu0 %v1611, 94
      %v1624 = vpop.permute.xlu0 %1623
      %1625 = vrot.lane.b32.xlu0 %v1612, 94
      %v1626 = vpop.permute.xlu0 %1625
      %1627 = vrot.lane.b32.xlu0 %v1613, 94
      %v1628 = vpop.permute.xlu0 %1627
      %1629 = vrot.lane.b32.xlu0 %v1614, 94
      %v1630 = vpop.permute.xlu0 %1629
      %1631 = vrot.lane.b32.xlu0 %v1615, 94
      %v1632 = vpop.permute.xlu0 %1631
      %1633 = vrot.lane.b32.xlu0 %v1616, 94
      %v1634 = vpop.permute.xlu0 %1633
      %v1635 = vsel %vm884, %v1618, %v1620
      %v1636 = vsel %vm884, %v1620, %v1622
      %v1637 = vsel %vm884, %v1622, %v1624
      %v1638 = vsel %vm884, %v1624, %v1626
      %v1639 = vsel %vm884, %v1626, %v1628
      %v1640 = vsel %vm884, %v1628, %v1630
      %v1641 = vsel %vm884, %v1630, %v1632
      %v1642 = vsel %vm884, %v1632, %v1634
      %1643 = vrot.lane.b32.xlu0 %v1532, 93
      %v1644 = vpop.permute.xlu0 %1643
      %1645 = vrot.lane.b32.xlu0 %v1521, 93
      %v1646 = vpop.permute.xlu0 %1645
      %1647 = vrot.lane.b32.xlu0 %v1522, 93
      %v1648 = vpop.permute.xlu0 %1647
      %1649 = vrot.lane.b32.xlu0 %v1523, 93
      %v1650 = vpop.permute.xlu0 %1649
      %1651 = vrot.lane.b32.xlu0 %v1524, 93
      %v1652 = vpop.permute.xlu0 %1651
      %1653 = vrot.lane.b32.xlu0 %v1525, 93
      %v1654 = vpop.permute.xlu0 %1653
      %1655 = vrot.lane.b32.xlu0 %v1526, 93
      %v1656 = vpop.permute.xlu0 %1655
      %1657 = vrot.lane.b32.xlu0 %v1527, 93
      %v1658 = vpop.permute.xlu0 %1657
      %1659 = vrot.lane.b32.xlu0 %v1535, 93
      %v1660 = vpop.permute.xlu0 %1659
      %v1661 = vsel %vm911, %v1644, %v1646
      %v1662 = vsel %vm911, %v1646, %v1648
      %v1663 = vsel %vm911, %v1648, %v1650
      %v1664 = vsel %vm911, %v1650, %v1652
      %v1665 = vsel %vm911, %v1652, %v1654
      %v1666 = vsel %vm911, %v1654, %v1656
      %v1667 = vsel %vm911, %v1656, %v1658
      %v1668 = vsel %vm911, %v1658, %v1660
      %1669 = vrot.lane.b32.xlu0 %v1538, 92
      %v1670 = vpop.permute.xlu0 %1669
      %1671 = vrot.lane.b32.xlu0 %v1539, 92
      %v1672 = vpop.permute.xlu0 %1671
      %1673 = vrot.lane.b32.xlu0 %v1540, 92
      %v1674 = vpop.permute.xlu0 %1673
      %1675 = vrot.lane.b32.xlu0 %v1541, 92
      %v1676 = vpop.permute.xlu0 %1675
      %1677 = vrot.lane.b32.xlu0 %v1542, 92
      %v1678 = vpop.permute.xlu0 %1677
      %1679 = vrot.lane.b32.xlu0 %v1543, 92
      %v1680 = vpop.permute.xlu0 %1679
      %1681 = vrot.lane.b32.xlu0 %v1544, 92
      %v1682 = vpop.permute.xlu0 %1681
      %1683 = vrot.lane.b32.xlu0 %v1545, 92
      %v1684 = vpop.permute.xlu0 %1683
      %1685 = vrot.lane.b32.xlu0 %v1546, 92
      %v1686 = vpop.permute.xlu0 %1685
      %v1687 = vsel %vm938, %v1670, %v1672
      %v1688 = vsel %vm938, %v1672, %v1674
      %v1689 = vsel %vm938, %v1674, %v1676
      %v1690 = vsel %vm938, %v1676, %v1678
      %v1691 = vsel %vm938, %v1678, %v1680
      %v1692 = vsel %vm938, %v1680, %v1682
      %v1693 = vsel %vm938, %v1682, %v1684
      %v1694 = vsel %vm938, %v1684, %v1686
      %v1696 = vrot.slane 0, 4
      %1697 = vrot.lane.b32.xlu0 %v1573, 60
      %v1698 = vpop.permute.xlu0 %1697
      %1699 = vrot.lane.b32.xlu0 %v1574, 60
      %v1700 = vpop.permute.xlu0 %1699
      %1701 = vrot.lane.b32.xlu0 %v1575, 60
      %v1702 = vpop.permute.xlu0 %1701
      %1703 = vrot.lane.b32.xlu0 %v1576, 60
      %v1704 = vpop.permute.xlu0 %1703
      %1705 = vrot.lane.b32.xlu0 %v1577, 60
      %v1706 = vpop.permute.xlu0 %1705
      %1707 = vrot.lane.b32.xlu0 %v1578, 60
      %v1708 = vpop.permute.xlu0 %1707
      %1709 = vrot.lane.b32.xlu0 %v1579, 60
      %v1710 = vpop.permute.xlu0 %1709
      %1711 = vrot.lane.b32.xlu0 %v1580, 60
      %v1712 = vpop.permute.xlu0 %1711
      %1713 = vrot.lane.b32.xlu0 %v1581, 60
      %v1714 = vpop.permute.xlu0 %1713
      %1715 = vrot.lane.b32.xlu0 %v1696, 60
      %v1716 = vpop.permute.xlu0 %1715
      %v1717 = vsel %vm968, %v1698, %v1700
      %v1718 = vsel %vm968, %v1700, %v1702
      %v1719 = vsel %vm968, %v1702, %v1704
      %v1720 = vsel %vm968, %v1704, %v1706
      %v1721 = vsel %vm968, %v1706, %v1708
      %v1722 = vsel %vm968, %v1708, %v1710
      %v1723 = vsel %vm968, %v1710, %v1712
      %v1724 = vsel %vm968, %v1712, %v1714
      %v1725 = vsel %vm968, %v1714, %v1716
      %v1726 = vrot.slane 0, 2
      %1727 = vrot.lane.b32.xlu0 %v1608, 59
      %v1728 = vpop.permute.xlu0 %1727
      %1729 = vrot.lane.b32.xlu0 %v1609, 59
      %v1730 = vpop.permute.xlu0 %1729
      %1731 = vrot.lane.b32.xlu0 %v1610, 59
      %v1732 = vpop.permute.xlu0 %1731
      %1733 = vrot.lane.b32.xlu0 %v1611, 59
      %v1734 = vpop.permute.xlu0 %1733
      %1735 = vrot.lane.b32.xlu0 %v1612, 59
      %v1736 = vpop.permute.xlu0 %1735
      %1737 = vrot.lane.b32.xlu0 %v1613, 59
      %v1738 = vpop.permute.xlu0 %1737
      %1739 = vrot.lane.b32.xlu0 %v1614, 59
      %v1740 = vpop.permute.xlu0 %1739
      %1741 = vrot.lane.b32.xlu0 %v1615, 59
      %v1742 = vpop.permute.xlu0 %1741
      %1743 = vrot.lane.b32.xlu0 %v1616, 59
      %v1744 = vpop.permute.xlu0 %1743
      %1745 = vrot.lane.b32.xlu0 %v1726, 59
      %v1746 = vpop.permute.xlu0 %1745
      %v1747 = vsel %vm999, %v1728, %v1730
      %v1748 = vsel %vm999, %v1730, %v1732
      %v1749 = vsel %vm999, %v1732, %v1734
      %v1750 = vsel %vm999, %v1734, %v1736
      %v1751 = vsel %vm999, %v1736, %v1738
      %v1752 = vsel %vm999, %v1738, %v1740
      %v1753 = vsel %vm999, %v1740, %v1742
      %v1754 = vsel %vm999, %v1742, %v1744
      %v1755 = vsel %vm999, %v1744, %v1746
      %1756 = vrot.lane.b32.xlu0 %v1532, 58
      %v1757 = vpop.permute.xlu0 %1756
      %1758 = vrot.lane.b32.xlu0 %v1521, 58
      %v1759 = vpop.permute.xlu0 %1758
      %1760 = vrot.lane.b32.xlu0 %v1522, 58
      %v1761 = vpop.permute.xlu0 %1760
      %1762 = vrot.lane.b32.xlu0 %v1523, 58
      %v1763 = vpop.permute.xlu0 %1762
      %1764 = vrot.lane.b32.xlu0 %v1524, 58
      %v1765 = vpop.permute.xlu0 %1764
      %1766 = vrot.lane.b32.xlu0 %v1525, 58
      %v1767 = vpop.permute.xlu0 %1766
      %1768 = vrot.lane.b32.xlu0 %v1526, 58
      %v1769 = vpop.permute.xlu0 %1768
      %1770 = vrot.lane.b32.xlu0 %v1527, 58
      %v1771 = vpop.permute.xlu0 %1770
      %1772 = vrot.lane.b32.xlu0 %v1535, 58
      %v1773 = vpop.permute.xlu0 %1772
      %1774 = vrot.lane.b32.xlu0 0, 58
      %v1775 = vpop.permute.xlu0 %1774
      %v1776 = vsel %vm1029, %v1757, %v1759
      %v1777 = vsel %vm1029, %v1759, %v1761
      %v1778 = vsel %vm1029, %v1761, %v1763
      %v1779 = vsel %vm1029, %v1763, %v1765
      %v1780 = vsel %vm1029, %v1765, %v1767
      %v1781 = vsel %vm1029, %v1767, %v1769
      %v1782 = vsel %vm1029, %v1769, %v1771
      %v1783 = vsel %vm1029, %v1771, %v1773
      %v1784 = vsel %vm1029, %v1773, %v1775
      %v1786 = vsel %vm763, %v1532, %v1565
      %v1789 = vsel %vm763, %v1521, %v1566
      %v1792 = vsel %vm763, %v1522, %v1567
      %v1795 = vsel %vm763, %v1523, %v1568
      %v1798 = vsel %vm763, %v1524, %v1569
      %v1801 = vsel %vm763, %v1525, %v1570
      %v1804 = vsel %vm763, %v1526, %v1571
      %v1807 = vsel %vm763, %v1527, %v1572
      %v1809 = vsel %vm763, %v1535, %v1564
      %v1811 = vsel %vm1039, %v1786, %v1600
      %v1813 = vsel %vm1039, %v1789, %v1601
      %v1815 = vsel %vm1039, %v1792, %v1602
      %v1817 = vsel %vm1039, %v1795, %v1603
      %v1819 = vsel %vm1039, %v1798, %v1604
      %v1821 = vsel %vm1039, %v1801, %v1605
      %v1823 = vsel %vm1039, %v1804, %v1606
      %v1825 = vsel %vm1039, %v1807, %v1607
      %v1827 = vsel %vm1039, %v1809, %v1599
      %vm1828 = vcmask 1045504
      %v1830 = vsel %vm1828, %v1811, %v1635
      %v1833 = vsel %vm1828, %v1813, %v1636
      %v1836 = vsel %vm1828, %v1815, %v1637
      %v1839 = vsel %vm1828, %v1817, %v1638
      %v1842 = vsel %vm1828, %v1819, %v1639
      %v1845 = vsel %vm1828, %v1821, %v1640
      %v1848 = vsel %vm1828, %v1823, %v1641
      %v1851 = vsel %vm1828, %v1825, %v1642
      %v1854 = vsel %vm1828, %v1827, %v1634
      %v1858 = vsel %vm763, %v1661, %v1687
      %v1861 = vsel %vm763, %v1662, %v1688
      %v1864 = vsel %vm763, %v1663, %v1689
      %v1867 = vsel %vm763, %v1664, %v1690
      %v1870 = vsel %vm763, %v1665, %v1691
      %v1873 = vsel %vm763, %v1666, %v1692
      %v1876 = vsel %vm763, %v1667, %v1693
      %v1879 = vsel %vm763, %v1668, %v1694
      %v1882 = vsel %vm763, %v1660, %v1686
      %v1884 = vsel %vm1039, %v1858, %v1717
      %v1886 = vsel %vm1039, %v1861, %v1718
      %v1888 = vsel %vm1039, %v1864, %v1719
      %v1890 = vsel %vm1039, %v1867, %v1720
      %v1892 = vsel %vm1039, %v1870, %v1721
      %v1894 = vsel %vm1039, %v1873, %v1722
      %v1896 = vsel %vm1039, %v1876, %v1723
      %v1898 = vsel %vm1039, %v1879, %v1724
      %v1900 = vsel %vm1039, %v1882, %v1725
      %v1902 = vsel %vm1828, %v1884, %v1747
      %v1905 = vsel %vm1828, %v1886, %v1748
      %v1908 = vsel %vm1828, %v1888, %v1749
      %v1911 = vsel %vm1828, %v1890, %v1750
      %v1914 = vsel %vm1828, %v1892, %v1751
      %v1917 = vsel %vm1828, %v1894, %v1752
      %v1920 = vsel %vm1828, %v1896, %v1753
      %v1923 = vsel %vm1828, %v1898, %v1754
      %v1926 = vsel %vm1828, %v1900, %v1755
      %v1928 = vld [vmem:[%s6] sm:$0x3]
      %v1929 = vld [vmem:[%s7] sm:$0xf]
      %1931 = vset.pattern.permute.xlu0 0
      %1932 = vperm.xlu0 %1931, %v1929
      %v1933 = vpop.permute.xlu0 %1932
      %vm1935 = vcmask 293888
      %v1937 = vsel %vm1935, %v1928, 0
      %v1940 = vsel %vm763, %v1776, 0
      %v1943 = vsel %vm763, %v1777, 0
      %v1946 = vsel %vm763, %v1778, 0
      %v1949 = vsel %vm763, %v1779, 0
      %v1952 = vsel %vm763, %v1780, 0
      %v1955 = vsel %vm763, %v1781, 0
      %v1958 = vsel %vm763, %v1782, 0
      %v1961 = vsel %vm763, %v1783, 0
      %v1964 = vsel %vm763, %v1784, 0
      %1966 = vmatprep.subr.bf16.mxu0 %v1833
      %1967 = vmatpush1.bf16.msra.mxu0 %v1830
      %1968 = vmatprep.subr.bf16.mxu0 %v1905
      %1969 = vmatpush1.bf16.msra.mxu0 %v1902
      %1970 = vmatprep.subr.bf16.mxu0 %v1943
      %1971 = vmatpush1.bf16.msra.mxu0 %v1940
      %1972 = vmatprep.subr.bf16.mxu0 0
      %1973 = vmatpush1.bf16.msra.mxu0 0
      %1974 = vmatprep.subr.bf16.mxu0 0
      %1975 = vmatpush1.bf16.msra.mxu0 0
      %1976 = vmatprep.subr.bf16.mxu0 0
      %1977 = vmatpush1.bf16.msra.mxu0 0
      %1978 = vmatprep.subr.bf16.mxu0 0
      %1979 = vmatpush1.bf16.msra.mxu0 0
      %1980 = vmatprep.subr.bf16.mxu0 0
      %1981 = vmatpush1.bf16.msra.mxu0 0
      %1982 = vmatprep.subr.bf16.mxu0 0
      %1983 = vmatpush1.bf16.msra.mxu0 0
      %1984 = vmatprep.subr.bf16.mxu0 0
      %1985 = vmatpush1.bf16.msra.mxu0 0
      %1986 = vmatprep.subr.bf16.mxu0 0
      %1987 = vmatpush1.bf16.msra.mxu0 0
      %1988 = vmatprep.subr.bf16.mxu0 0
      %1989 = vmatpush1.bf16.msra.mxu0 0
      %1990 = vmatprep.subr.bf16.mxu0 0
      %1991 = vmatpush1.bf16.msra.mxu0 0
      %1992 = vmatprep.subr.bf16.mxu0 0
      %1993 = vmatpush1.bf16.msra.mxu0 0
      %1994 = vmatprep.subr.bf16.mxu0 0
      %1995 = vmatpush1.bf16.msra.mxu0 0
      %1996 = vmatprep.subr.bf16.mxu0 0
      %1997 = vmatpush1.bf16.msra.mxu0 0
      %1998 = vmatprep.mubr.bf16.mxu0 0
      %1999 = vmatmul.mubr.bf16.gmra.mrb[0].mxu0 %v1937
      %v2000 = vpop.f32.mrb[0].mxu0
      %v2001 = vadd.f32 %v1933, %v2000
      %v2002 = vpop.f32.mrb[0].mxu0
      %v2003 = vadd.f32 %v1933, %v2002
      %v2004 = vpop.f32.mrb[0].mxu0
      %v2005 = vpop.f32.mrb[0].mxu0
      %2006 = vdwg.mxu0
      %2007 = vmatprep.subr.bf16.mxu0 %v1839
      %2008 = vmatpush1.bf16.msra.mxu0 %v1836
      %2009 = vmatprep.subr.bf16.mxu0 %v1911
      %2010 = vmatpush1.bf16.msra.mxu0 %v1908
      %2011 = vmatprep.subr.bf16.mxu0 %v1949
      %2012 = vmatpush1.bf16.msra.mxu0 %v1946
      %2013 = vmatprep.subr.bf16.mxu0 0
      %2014 = vmatpush1.bf16.msra.mxu0 0
      %2015 = vmatprep.subr.bf16.mxu0 0
      %2016 = vmatpush1.bf16.msra.mxu0 0
      %2017 = vmatprep.subr.bf16.mxu0 0
      %2018 = vmatpush1.bf16.msra.mxu0 0
      %2019 = vmatprep.subr.bf16.mxu0 0
      %2020 = vmatpush1.bf16.msra.mxu0 0
      %2021 = vmatprep.subr.bf16.mxu0 0
      %2022 = vmatpush1.bf16.msra.mxu0 0
      %2023 = vmatprep.subr.bf16.mxu0 0
      %2024 = vmatpush1.bf16.msra.mxu0 0
      %2025 = vmatprep.subr.bf16.mxu0 0
      %2026 = vmatpush1.bf16.msra.mxu0 0
      %2027 = vmatprep.subr.bf16.mxu0 0
      %2028 = vmatpush1.bf16.msra.mxu0 0
      %2029 = vmatprep.subr.bf16.mxu0 0
      %2030 = vmatpush1.bf16.msra.mxu0 0
      %2031 = vmatprep.subr.bf16.mxu0 0
      %2032 = vmatpush1.bf16.msra.mxu0 0
      %2033 = vmatprep.subr.bf16.mxu0 0
      %2034 = vmatpush1.bf16.msra.mxu0 0
      %2035 = vmatprep.subr.bf16.mxu0 0
      %2036 = vmatpush1.bf16.msra.mxu0 0
      %2037 = vmatprep.subr.bf16.mxu0 0
      %2038 = vmatpush1.bf16.msra.mxu0 0
      %2039 = vmatprep.mubr.bf16.mxu0 0
      %2040 = vmatmul.mubr.bf16.gmra.mrb[0].mxu0 %v1937
      %v2041 = vpop.f32.mrb[0].mxu0
      %v2042 = vadd.f32 %v1933, %v2041
      %v2043 = vpop.f32.mrb[0].mxu0
      %v2044 = vadd.f32 %v1933, %v2043
      %v2045 = vpop.f32.mrb[0].mxu0
      %v2046 = vpop.f32.mrb[0].mxu0
      %2047 = vdwg.mxu0
      %2048 = vmatprep.subr.bf16.mxu0 %v1845
      %2049 = vmatpush1.bf16.msra.mxu0 %v1842
      %2050 = vmatprep.subr.bf16.mxu0 %v1917
      %2051 = vmatpush1.bf16.msra.mxu0 %v1914
      %2052 = vmatprep.subr.bf16.mxu0 %v1955
      %2053 = vmatpush1.bf16.msra.mxu0 %v1952
      %2054 = vmatprep.subr.bf16.mxu0 0
      %2055 = vmatpush1.bf16.msra.mxu0 0
      %2056 = vmatprep.subr.bf16.mxu0 0
      %2057 = vmatpush1.bf16.msra.mxu0 0
      %2058 = vmatprep.subr.bf16.mxu0 0
      %2059 = vmatpush1.bf16.msra.mxu0 0
      %2060 = vmatprep.subr.bf16.mxu0 0
      %2061 = vmatpush1.bf16.msra.mxu0 0
      %2062 = vmatprep.subr.bf16.mxu0 0
      %2063 = vmatpush1.bf16.msra.mxu0 0
      %2064 = vmatprep.subr.bf16.mxu0 0
      %2065 = vmatpush1.bf16.msra.mxu0 0
      %2066 = vmatprep.subr.bf16.mxu0 0
      %2067 = vmatpush1.bf16.msra.mxu0 0
      %2068 = vmatprep.subr.bf16.mxu0 0
      %2069 = vmatpush1.bf16.msra.mxu0 0
      %2070 = vmatprep.subr.bf16.mxu0 0
      %2071 = vmatpush1.bf16.msra.mxu0 0
      %2072 = vmatprep.subr.bf16.mxu0 0
      %2073 = vmatpush1.bf16.msra.mxu0 0
      %2074 = vmatprep.subr.bf16.mxu0 0
      %2075 = vmatpush1.bf16.msra.mxu0 0
      %2076 = vmatprep.subr.bf16.mxu0 0
      %2077 = vmatpush1.bf16.msra.mxu0 0
      %2078 = vmatprep.subr.bf16.mxu0 0
      %2079 = vmatpush1.bf16.msra.mxu0 0
      %2080 = vmatprep.mubr.bf16.mxu0 0
      %2081 = vmatmul.mubr.bf16.gmra.mrb[0].mxu0 %v1937
      %v2082 = vpop.f32.mrb[0].mxu0
      %v2083 = vadd.f32 %v1933, %v2082
      %v2084 = vpop.f32.mrb[0].mxu0
      %v2085 = vadd.f32 %v1933, %v2084
      %v2086 = vpop.f32.mrb[0].mxu0
      %v2087 = vpop.f32.mrb[0].mxu0
      %2088 = vdwg.mxu0
      %2089 = vmatprep.subr.bf16.mxu0 %v1851
      %2090 = vmatpush1.bf16.msra.mxu0 %v1848
      %2091 = vmatprep.subr.bf16.mxu0 %v1923
      %2092 = vmatpush1.bf16.msra.mxu0 %v1920
      %2093 = vmatprep.subr.bf16.mxu0 %v1961
      %2094 = vmatpush1.bf16.msra.mxu0 %v1958
      %2095 = vmatprep.subr.bf16.mxu0 0
      %2096 = vmatpush1.bf16.msra.mxu0 0
      %2097 = vmatprep.subr.bf16.mxu0 0
      %2098 = vmatpush1.bf16.msra.mxu0 0
      %2099 = vmatprep.subr.bf16.mxu0 0
      %2100 = vmatpush1.bf16.msra.mxu0 0
      %2101 = vmatprep.subr.bf16.mxu0 0
      %2102 = vmatpush1.bf16.msra.mxu0 0
      %2103 = vmatprep.subr.bf16.mxu0 0
      %2104 = vmatpush1.bf16.msra.mxu0 0
      %2105 = vmatprep.subr.bf16.mxu0 0
      %2106 = vmatpush1.bf16.msra.mxu0 0
      %2107 = vmatprep.subr.bf16.mxu0 0
      %2108 = vmatpush1.bf16.msra.mxu0 0
      %2109 = vmatprep.subr.bf16.mxu0 0
      %2110 = vmatpush1.bf16.msra.mxu0 0
      %2111 = vmatprep.subr.bf16.mxu0 0
      %2112 = vmatpush1.bf16.msra.mxu0 0
      %2113 = vmatprep.subr.bf16.mxu0 0
      %2114 = vmatpush1.bf16.msra.mxu0 0
      %2115 = vmatprep.subr.bf16.mxu0 0
      %2116 = vmatpush1.bf16.msra.mxu0 0
      %2117 = vmatprep.subr.bf16.mxu0 0
      %2118 = vmatpush1.bf16.msra.mxu0 0
      %2119 = vmatprep.subr.bf16.mxu0 0
      %2120 = vmatpush1.bf16.msra.mxu0 0
      %2121 = vmatprep.mubr.bf16.mxu0 0
      %2122 = vmatmul.mubr.bf16.gmra.mrb[0].mxu0 %v1937
      %v2123 = vpop.f32.mrb[0].mxu0
      %v2124 = vadd.f32 %v1933, %v2123
      %v2125 = vpop.f32.mrb[0].mxu0
      %v2126 = vadd.f32 %v1933, %v2125
      %v2127 = vpop.f32.mrb[0].mxu0
      %v2128 = vpop.f32.mrb[0].mxu0
      %2129 = vdwg.mxu0
      %2130 = vmatprep.subr.bf16.mxu0 0
      %2131 = vmatpush1.bf16.msra.mxu0 %v1854
      %2132 = vmatprep.subr.bf16.mxu0 0
      %2133 = vmatpush1.bf16.msra.mxu0 %v1926
      %2134 = vmatprep.subr.bf16.mxu0 0
      %2135 = vmatpush1.bf16.msra.mxu0 %v1964
      %2136 = vmatprep.subr.bf16.mxu0 0
      %2137 = vmatpush1.bf16.msra.mxu0 0
      %2138 = vmatprep.subr.bf16.mxu0 0
      %2139 = vmatpush1.bf16.msra.mxu0 0
      %2140 = vmatprep.subr.bf16.mxu0 0
      %2141 = vmatpush1.bf16.msra.mxu0 0
      %2142 = vmatprep.subr.bf16.mxu0 0
      %2143 = vmatpush1.bf16.msra.mxu0 0
      %2144 = vmatprep.subr.bf16.mxu0 0
      %2145 = vmatpush1.bf16.msra.mxu0 0
      %2146 = vmatprep.subr.bf16.mxu0 0
      %2147 = vmatpush1.bf16.msra.mxu0 0
      %2148 = vmatprep.subr.bf16.mxu0 0
      %2149 = vmatpush1.bf16.msra.mxu0 0
      %2150 = vmatprep.subr.bf16.mxu0 0
      %2151 = vmatpush1.bf16.msra.mxu0 0
      %2152 = vmatprep.subr.bf16.mxu0 0
      %2153 = vmatpush1.bf16.msra.mxu0 0
      %2154 = vmatprep.subr.bf16.mxu0 0
      %2155 = vmatpush1.bf16.msra.mxu0 0
      %2156 = vmatprep.subr.bf16.mxu0 0
      %2157 = vmatpush1.bf16.msra.mxu0 0
      %2158 = vmatprep.subr.bf16.mxu0 0
      %2159 = vmatpush1.bf16.msra.mxu0 0
      %2160 = vmatprep.subr.bf16.mxu0 0
      %2161 = vmatpush1.bf16.msra.mxu0 0
      %2162 = vmatprep.mubr.bf16.mxu0 0
      %2163 = vmatmul.mubr.bf16.gmra.mrb[0].mxu0 %v1937
      %v2164 = vpop.f32.mrb[0].mxu0
      %v2165 = vadd.f32 %v1933, %v2164
      %v2166 = vpop.f32.mrb[0].mxu0
      %v2167 = vpop.f32.mrb[0].mxu0
      %v2168 = vpop.f32.mrb[0].mxu0
      %2169 = vdwg.mxu0
      %v2170 = vmax.f32 %v2001, 0.0
      %v2171 = vmax.f32 %v2003, 0.0
      %v2172 = vmax.f32 %v2042, 0.0
      %v2173 = vmax.f32 %v2044, 0.0
      %v2174 = vmax.f32 %v2083, 0.0
      %v2175 = vmax.f32 %v2085, 0.0
      %v2176 = vmax.f32 %v2124, 0.0
      %v2177 = vmax.f32 %v2126, 0.0
      %v2178 = vmax.f32 %v2165, 0.0
      %v2187 = vcombine.low %v2170, %v2171
      %v2188 = vcombine.low %v2172, %v2173
      %v2189 = vcombine.low %v2174, %v2175
      %v2190 = vcombine.low %v2176, %v2177
      %2195 = vst [vmem:[%s352] sm:$0xff] %v2187
      %2196 = vst [vmem:[%s352 + $0x8] sm:$0xff] %v2188
      %2197 = vst [vmem:[%s352 + $0x10] sm:$0xff] %v2189
      %2198 = vst [vmem:[%s352 + $0x18] sm:$0xff] %v2190
      %vm2199 = vcmask 519168
      %2200 = vst.msk [vmem:[%s352 + $0x20] sm:$0xf] %vm2199, %v2178
      %p2201 = scmp.lt.s32.totalorder %s20, 1
      %s2202 = scalar_select %p2201, %s20, 1
      %s2203 = smul.addr %s2202, 9
      %s2204 = smul.addr %s2203, 4
      %s2205 = scalar_lea.vmem %s9, %s2204
      // Predicated region
      $region57: #{unet_up_block_forward.1} parent=55 // pred_check
        %p2206 = pneg %p237
      $region58: #{unet_up_block_forward.1} parent=55 // pred_check_branch
        %2208 = sbr.rel (%p2206) target = $region60
      $region59: #{unet_up_block_forward.1} parent=55 // pred_region
        _
      $region60: #{unet_up_block_forward.1} parent=55 // pred_fallthru
        _
    $region56: #{unet_up_block_forward.1} parent=5 // pred_fallthru
      _
    %p2209 = scmp.le.s32.totalorder 2, %s15
    // Predicated region
    $region61: #{unet_up_block_forward.1} parent=5 // pred_check
      %p2210 = pneg %p2209
    $region62: #{unet_up_block_forward.1} parent=5 // pred_check_branch
      %2212 = sbr.rel (%p2210) target = $region64
    $region63: #{unet_up_block_forward.1} parent=5 // pred_region
      %s2213 = ssub.s32 %s15, 2
      // Predicated region
      $region65: #{unet_up_block_forward.1} parent=63 // pred_check
        %p2214 = pneg %p243
      $region66: #{unet_up_block_forward.1} parent=63 // pred_check_branch
        %2216 = sbr.rel (%p2214) target = $region68
      $region67: #{unet_up_block_forward.1} parent=63 // pred_region
        %p2217 = scmp.lt.s32.totalorder %s21, 1
        %s2218 = scalar_select %p2217, %s21, 1
        %s2219 = smul.addr %s2218, 9
        %s2220 = smul.addr %s2219, 4
        %s2221 = scalar_lea.vmem %s9, %s2220
      $region68: #{unet_up_block_forward.1} parent=63 // pred_fallthru
        _
    $region64: #{unet_up_block_forward.1} parent=5 // pred_fallthru
      _
  $region6: #{unet_up_block_forward.1} parent=0 // loop_footer
    %s19 = sadd.s32 1, %s15
  $region7: #{unet_up_block_forward.1} parent=0 // loop_footer_branch
    %14 = sbr.rel target = $region3
  $region8: #{unet_up_block_forward.1} parent=0 // loop_exit
    _

</llo_original>
